<compile_context>
chip_gen: v5e
topology: v5e:2x2
jax: 0.10.0
libtpu: 0.0.40
codegen_flags: <defaults>
</compile_context>

<pallas_src>
import functools

import jax
import jax.numpy as jnp
import numpy as np
from jax.experimental import pallas as pl
from jax.experimental.pallas import tpu as pltpu


def _ceil_div(a, b):
    return -(-a // b)


# ---------------------------------------------------------------------------
# Kernel 1: 1x1 conv (tiny channel weighted sum on the VPU) + bias + sigmoid.
#   x block: (1, Cin, St, 128)  flattened row-major pixels, (sublane,lane) dense
#   w: (Cout*Cin,) SMEM scalars, b: (Cout,) SMEM scalars
#   o block: (1, Cout, St, 128) dense, unmasked stores
# ---------------------------------------------------------------------------
def _conv1x1_sigmoid_kernel(x_ref, w_ref, b_ref, o_ref):
    x = x_ref[...]                                   # (1, Cin, St, 128)
    cin = x.shape[1]
    cout = o_ref.shape[1]
    for co in range(cout):                           # static tiny loops (Cout=1, Cin=4)
        acc = jnp.zeros(x.shape[2:], jnp.float32) + b_ref[co]
        for ci in range(cin):
            acc = acc + x[0, ci] * w_ref[co * cin + ci]
        # direct per-channel store (no concatenate along the channel axis)
        o_ref[0, co] = 1.0 / (1.0 + jnp.exp(-acc))


def conv1x1_sigmoid_flat(x, w, b, *, max_tile_rows=2048):
    """x: (N, Cin, H, W) f32, w: (Cout, Cin), b: (Cout,).

    Returns the sigmoid output in flattened-pixel layout (N, Cout, S, 128),
    zero padded past H*W."""
    N, Cin, H, W = x.shape
    Cout = w.shape[0]
    HW = H * W

    S = _ceil_div(HW, 128)
    if S > max_tile_rows:
        S = _ceil_div(S, 8) * 8          # guarantee a multiple-of-8 row tile exists
    P = S * 128

    xr = x.reshape(N, Cin, HW).astype(jnp.float32)
    if P != HW:
        xr = jnp.pad(xr, ((0, 0), (0, 0), (0, P - HW)))
    xr = xr.reshape(N, Cin, S, 128)

    if S <= max_tile_rows:
        st = S                            # whole image per grid step
    else:                                 # largest multiple-of-8 divisor <= cap
        st = 8
        cap = max_tile_rows - (max_tile_rows % 8)
        for d in range(cap, 7, -8):
            if S % d == 0:
                st = d
                break

    w_flat = w.reshape(-1).astype(jnp.float32)
    b_flat = b.reshape(-1).astype(jnp.float32)

    return pl.pallas_call(
        _conv1x1_sigmoid_kernel,
        out_shape=jax.ShapeDtypeStruct((N, Cout, S, 128), jnp.float32),
        grid=(N, S // st),
        in_specs=[
            pl.BlockSpec((1, Cin, st, 128), lambda n, s: (n, 0, s, 0)),
            pl.BlockSpec(memory_space=pltpu.MemorySpace.SMEM),   # weights
            pl.BlockSpec(memory_space=pltpu.MemorySpace.SMEM),   # bias
        ],
        out_specs=pl.BlockSpec((1, Cout, st, 128), lambda n, s: (n, 0, s, 0)),
        compiler_params=pltpu.CompilerParams(
            dimension_semantics=("parallel", "parallel"),
            vmem_limit_bytes=48 * 1024 * 1024,
        ),
    )(xr, w_flat, b_flat)


# ---------------------------------------------------------------------------
# Kernel 2 (fast path, Wo | 128): 3x3 conv (pad=1) + bias + sigmoid on a
# row-major flattened image.  x block (1, S, 128); the 9 taps are pltpu.roll
# rotations of one loaded slab; zero padding handled with iota-derived masks.
# Emits sigmoid output and (optionally) the pre-sigmoid next-level input.
# ---------------------------------------------------------------------------
def _conv3x3_sigmoid_flat_kernel(x_ref, w_ref, b_ref, *out_refs, Ho, Wo, emit_pre):
    S = x_ref.shape[1]
    P = Ho * Wo
    z = x_ref[0]                                              # (S, 128)
    lane = jax.lax.broadcasted_iota(jnp.int32, (S, 128), 1)
    pos = jax.lax.broadcasted_iota(jnp.int32, (S, 128), 0) * 128 + lane
    xcoord = lane & (Wo - 1)                                  # p % Wo (Wo | 128 => power of 2)

    acc = jnp.zeros((S, 128), jnp.float32) + b_ref[0]
    for dy in (-1, 0, 1):
        for dx in (-1, 0, 1):
            wk = w_ref[3 * (dy + 1) + (dx + 1)]
            k = dy * Wo + dx                                  # flattened tap offset
            if k == 0:
                shifted = z
            else:
                a_roll = pltpu.roll(z, shift=(-k) % 128, axis=1)   # lane rotate (XLU)
                if S > 1:
                    # elements crossing a 128-lane row come from the adjacent sublane row
                    b_roll = pltpu.roll(a_roll, shift=(-1 if k > 0 else 1) % S, axis=0)
                    take_a = (lane < 128 - k) if k > 0 else (lane >= -k)
                    shifted = jnp.where(take_a, a_roll, b_roll)
                else:
                    shifted = a_roll
            # zero-padding (pad=1) masks; every wrap-around position is also masked.
            mask = None
            if dy == -1:
                mask = pos >= Wo
            elif dy == 1:
                mask = pos < P - Wo
            if dx == -1:
                m = xcoord != 0
                mask = m if mask is None else (mask & m)
            elif dx == 1:
                m = xcoord != Wo - 1
                mask = m if mask is None else (mask & m)
            tap = shifted if mask is None else jnp.where(mask, shifted, 0.0)
            acc = acc + tap * wk

    if emit_pre:
        out_refs[1][0] = acc                                  # next level's input
    out_refs[0][0] = 1.0 / (1.0 + jnp.exp(-acc))


def conv3x3_sigmoid_flat(up_flat, w9, b1, *, Ho, Wo, emit_pre):
    """up_flat: (N, S, 128) flattened (Ho, Wo) conv input (zero padded).
    Returns (sigmoid, pre_or_None) in the same flattened layout."""
    N, S, _ = up_flat.shape
    out_shape = [jax.ShapeDtypeStruct((N, S, 128), jnp.float32)]
    out_specs = [pl.BlockSpec((1, S, 128), lambda n: (n, 0, 0))]
    if emit_pre:
        out_shape.append(jax.ShapeDtypeStruct((N, S, 128), jnp.float32))
        out_specs.append(pl.BlockSpec((1, S, 128), lambda n: (n, 0, 0)))

    outs = pl.pallas_call(
        functools.partial(_conv3x3_sigmoid_flat_kernel, Ho=Ho, Wo=Wo,
                          emit_pre=emit_pre),
        out_shape=tuple(out_shape),
        grid=(N,),
        in_specs=[
            pl.BlockSpec((1, S, 128), lambda n: (n, 0, 0)),
            pl.BlockSpec(memory_space=pltpu.MemorySpace.SMEM),   # (9,) weights
            pl.BlockSpec(memory_space=pltpu.MemorySpace.SMEM),   # (1,) bias
        ],
        out_specs=tuple(out_specs),
        compiler_params=pltpu.CompilerParams(
            dimension_semantics=("parallel",),
            vmem_limit_bytes=48 * 1024 * 1024,
        ),
    )(up_flat, w9, b1)
    return (outs[0], outs[1]) if emit_pre else (outs[0], None)


# ---------------------------------------------------------------------------
# Kernel 2 (general fallback, Wo does not divide 128): 2-D halo-padded image.
# ---------------------------------------------------------------------------
def _conv3x3_sigmoid_halo_kernel(xp_ref, w_ref, b_ref, *out_refs, emit_pre):
    sig_ref = out_refs[0]
    Ho, Wo = sig_ref.shape[1], sig_ref.shape[2]
    xp = xp_ref[...]                                 # (1, Ho+2, Wo+2)
    acc = jnp.zeros((1, Ho, Wo), jnp.float32) + b_ref[0]
    for ky in range(3):
        for kx in range(3):
            acc = acc + xp[:, ky:ky + Ho, kx:kx + Wo] * w_ref[3 * ky + kx]
    if emit_pre:
        out_refs[1][...] = acc
    sig_ref[...] = 1.0 / (1.0 + jnp.exp(-acc))


def conv3x3_sigmoid_halo(x_padded, w9, b1, *, emit_pre):
    N, Hp, Wp = x_padded.shape
    Ho, Wo = Hp - 2, Wp - 2
    out_shape = [jax.ShapeDtypeStruct((N, Ho, Wo), jnp.float32)]
    out_specs = [pl.BlockSpec((1, Ho, Wo), lambda n: (n, 0, 0))]
    if emit_pre:
        out_shape.append(jax.ShapeDtypeStruct((N, Ho, Wo), jnp.float32))
        out_specs.append(pl.BlockSpec((1, Ho, Wo), lambda n: (n, 0, 0)))
    outs = pl.pallas_call(
        functools.partial(_conv3x3_sigmoid_halo_kernel, emit_pre=emit_pre),
        out_shape=tuple(out_shape),
        grid=(N,),
        in_specs=[
            pl.BlockSpec((1, Hp, Wp), lambda n: (n, 0, 0)),
            pl.BlockSpec(memory_space=pltpu.MemorySpace.SMEM),
            pl.BlockSpec(memory_space=pltpu.MemorySpace.SMEM),
        ],
        out_specs=tuple(out_specs),
        compiler_params=pltpu.CompilerParams(
            dimension_semantics=("parallel",),
            vmem_limit_bytes=48 * 1024 * 1024,
        ),
    )(x_padded, w9, b1)
    return (outs[0], outs[1]) if emit_pre else (outs[0], None)


# ---------------------------------------------------------------------------
# Module forward (wrapper / glue)
# ---------------------------------------------------------------------------
def _unflatten_nchw(flat, C, H, W):
    """(N, C, S, 128) flattened-pixel layout -> (N, C, H, W)."""
    N = flat.shape[0]
    P = flat.shape[2] * flat.shape[3]
    out = flat.reshape(N, C, P)
    if P != H * W:
        out = out[:, :, :H * W]
    return out.reshape(N, C, H, W)


def _flatten_pixels(x2d):
    """(N, H, W) -> (N, S, 128) zero-padded flattened-pixel layout."""
    N, H, W = x2d.shape
    P = H * W
    S = _ceil_div(P, 128)
    flat = x2d.reshape(N, P)
    if S * 128 != P:
        flat = jnp.pad(flat, ((0, 0), (0, S * 128 - P)))
    return flat.reshape(N, S, 128)


def multiscale_extension_pyramid_forward(x, params, *, scales, original_dim):
    """x: (N, Cin, H, W) NCHW. Returns a list of NCHW outputs (one per scale)."""
    N, Cin, H, W = x.shape
    w1 = params["initial_conv_w"]          # (Cout, Cin)  kernel_size=1 squeezed
    b1 = params["initial_conv_b"]          # (Cout,)
    Cout = w1.shape[0]

    out0_flat = conv1x1_sigmoid_flat(x, w1, b1)            # (N, Cout, S0, 128)
    results = [_unflatten_nchw(out0_flat, Cout, H, W)]

    # TODO(synk): pyramid 3x3 path implemented for output_channels == 1 (module default).
    assert Cout == 1, "pyramid 3x3 kernels implemented for output_channels=1"

    n_layers = len(scales) - 1
    cur_flat = out0_flat[:, 0]             # (N, S, 128) flattened current activation
    Hc, Wc = H, W

    for li, scale in enumerate(scales[1:]):
        Ho = original_dim[0] // scale
        Wo = original_dim[1] // scale
        emit_pre = (li + 1) < n_layers     # last level never feeds another layer

        # Nearest-neighbour source indices (PyTorch legacy 'nearest' floor
        # convention) expressed directly in flattened-pixel space, so the
        # resize is ONE fused XLA gather from the previous level's flat
        # output straight into the next kernel's flat, padded input layout.
        idx_h = (np.arange(Ho) * Hc) // Ho
        idx_w = (np.arange(Wo) * Wc) // Wo
        src = (idx_h[:, None] * Wc + idx_w[None, :]).reshape(-1).astype(np.int32)

        w9 = params["pyramid_w"][li].reshape(-1).astype(jnp.float32)   # (9,)
        b3 = params["pyramid_b"][li].reshape(-1).astype(jnp.float32)   # (1,)

        if 128 % Wo == 0 and Wo < 128:
            # Lane-dense flattened path (pltpu.roll taps).
            P2 = Ho * Wo
            S2 = _ceil_div(P2, 128)
            src_pad = np.zeros((S2 * 128,), np.int32)
            src_pad[:P2] = src
            up_flat = cur_flat.reshape(N, -1)[:, src_pad].reshape(N, S2, 128)
            sig_flat, pre_flat = conv3x3_sigmoid_flat(
                up_flat, w9, b3, Ho=Ho, Wo=Wo, emit_pre=emit_pre)
            results.append(_unflatten_nchw(sig_flat[:, None], 1, Ho, Wo))
            if emit_pre:
                cur_flat = pre_flat
                Hc, Wc = Ho, Wo
        else:
            # General fallback: 2-D halo-padded kernel.
            up = cur_flat.reshape(N, -1)[:, src].reshape(N, Ho, Wo)
            up_p = jnp.pad(up, ((0, 0), (1, 1), (1, 1)))
            sig, pre = conv3x3_sigmoid_halo(up_p, w9, b3, emit_pre=emit_pre)
            results.append(sig[:, None])
            if emit_pre:
                cur_flat = _flatten_pixels(pre)
                Hc, Wc = Ho, Wo
    return results


# ---------------------------------------------------------------------------
# Pure-JAX reference (correctness check only)
# ---------------------------------------------------------------------------
def _reference(x, params, scales, original_dim):
    w1, b1 = params["initial_conv_w"], params["initial_conv_b"]
    out = jax.nn.sigmoid(jnp.einsum("nchw,oc->nohw", x, w1) + b1[None, :, None, None])
    res = [out]
    cur = out
    for li, scale in enumerate(scales[1:]):
        Ho, Wo = original_dim[0] // scale, original_dim[1] // scale
        Hc, Wc = cur.shape[2], cur.shape[3]
        idx_h = (jnp.arange(Ho) * Hc) // Ho
        idx_w = (jnp.arange(Wo) * Wc) // Wo
        up = cur[:, :, idx_h[:, None], idx_w[None, :]]
        conv = jax.lax.conv_general_dilated(
            up, params["pyramid_w"][li], (1, 1), ((1, 1), (1, 1)),
            dimension_numbers=("NCHW", "OIHW", "NCHW"),
        ) + params["pyramid_b"][li][None, :, None, None]
        res.append(jax.nn.sigmoid(conv))
        cur = conv
    return res


if __name__ == "__main__":
    key = jax.random.PRNGKey(0)
    kx, kw1, kb1, kw3a, kb3a, kw3b, kb3b = jax.random.split(key, 7)

    # Small shapes consistent with the module (input_channels=4, output_channels=1)
    N, Cin, H, W = 2, 4, 16, 16
    Cout = 1
    scales = [1, 2, 4]                   # exercises both emit_pre=True and False
    original_dim = (16, 16)

    x = jax.random.normal(kx, (N, Cin, H, W), jnp.float32)
    params = {
        "initial_conv_w": 0.2 * jax.random.normal(kw1, (Cout, Cin), jnp.float32),
        "initial_conv_b": 0.1 * jax.random.normal(kb1, (Cout,), jnp.float32),
        "pyramid_w": [
            0.2 * jax.random.normal(kw3a, (Cout, Cout, 3, 3), jnp.float32),
            0.2 * jax.random.normal(kw3b, (Cout, Cout, 3, 3), jnp.float32),
        ],
        "pyramid_b": [
            0.1 * jax.random.normal(kb3a, (Cout,), jnp.float32),
            0.1 * jax.random.normal(kb3b, (Cout,), jnp.float32),
        ],
    }

    fwd = jax.jit(functools.partial(
        multiscale_extension_pyramid_forward,
        scales=scales, original_dim=original_dim))
    outs = jax.block_until_ready(fwd(x, params))

    refs = _reference(x, params, scales, original_dim)
    for o, r in zip(outs, refs):
        np.testing.assert_allclose(np.asarray(o), np.asarray(r), rtol=1e-5, atol=1e-5)

    print("KERNEL_OK")
</pallas_src>

<mosaic_0001>
module attributes {stable_mosaic.version = 11 : i64} {
  func.func @_conv1x1_sigmoid_kernel(%arg0: i32, %arg1: i32, %arg2: memref<1x4x2x128xf32, #tpu.memory_space<vmem>>, %arg3: memref<4xf32, #tpu.memory_space<smem>>, %arg4: memref<1xf32, #tpu.memory_space<smem>>, %arg5: memref<1x1x2x128xf32, #tpu.memory_space<vmem>>) attributes {dimension_semantics = [#tpu.dimension_semantics<parallel>, #tpu.dimension_semantics<parallel>], iteration_bounds = array<i64: 2, 1>, scalar_prefetch = 0 : i64, scratch_operands = 0 : i64, tpu.core_type = #tpu.core_type<tc>, window_params = [{transform_indices = @transform_0, window_bounds = array<i64: 1, 4, 2, 128>}, {transform_indices = @transform_1, window_bounds = array<i64: 4>}, {transform_indices = @transform_2, window_bounds = array<i64: 1>}, {transform_indices = @transform_3, window_bounds = array<i64: 1, 1, 2, 128>}]} {
    %c0 = arith.constant 0 : index
    %c0_0 = arith.constant 0 : index
    %c0_1 = arith.constant 0 : index
    %c0_2 = arith.constant 0 : index
    %0 = vector.load %arg2[%c0, %c0_0, %c0_1, %c0_2] : memref<1x4x2x128xf32, #tpu.memory_space<vmem>>, vector<1x4x2x128xf32>
    %cst = arith.constant 0.000000e+00 : f32
    %1 = vector.broadcast %cst : f32 to vector<2x128xf32>
    %c0_3 = arith.constant 0 : index
    %2 = memref.load %arg4[%c0_3] : memref<1xf32, #tpu.memory_space<smem>>
    %3 = vector.broadcast %2 : f32 to vector<2x128xf32>
    %4 = arith.addf %1, %3 : vector<2x128xf32>
    %5 = vector.extract_strided_slice %0 {offsets = [0, 0, 0, 0], sizes = [1, 1, 2, 128], strides = [1, 1, 1, 1]} : vector<1x4x2x128xf32> to vector<1x1x2x128xf32>
    %6 = vector.shape_cast %5 : vector<1x1x2x128xf32> to vector<2x128xf32>
    %c0_4 = arith.constant 0 : index
    %7 = memref.load %arg3[%c0_4] : memref<4xf32, #tpu.memory_space<smem>>
    %8 = vector.broadcast %7 : f32 to vector<2x128xf32>
    %9 = arith.mulf %6, %8 : vector<2x128xf32>
    %10 = arith.addf %4, %9 : vector<2x128xf32>
    %11 = vector.extract_strided_slice %0 {offsets = [0, 1, 0, 0], sizes = [1, 1, 2, 128], strides = [1, 1, 1, 1]} : vector<1x4x2x128xf32> to vector<1x1x2x128xf32>
    %12 = vector.shape_cast %11 : vector<1x1x2x128xf32> to vector<2x128xf32>
    %c1 = arith.constant 1 : index
    %13 = memref.load %arg3[%c1] : memref<4xf32, #tpu.memory_space<smem>>
    %14 = vector.broadcast %13 : f32 to vector<2x128xf32>
    %15 = arith.mulf %12, %14 : vector<2x128xf32>
    %16 = arith.addf %10, %15 : vector<2x128xf32>
    %17 = vector.extract_strided_slice %0 {offsets = [0, 2, 0, 0], sizes = [1, 1, 2, 128], strides = [1, 1, 1, 1]} : vector<1x4x2x128xf32> to vector<1x1x2x128xf32>
    %18 = vector.shape_cast %17 : vector<1x1x2x128xf32> to vector<2x128xf32>
    %c2 = arith.constant 2 : index
    %19 = memref.load %arg3[%c2] : memref<4xf32, #tpu.memory_space<smem>>
    %20 = vector.broadcast %19 : f32 to vector<2x128xf32>
    %21 = arith.mulf %18, %20 : vector<2x128xf32>
    %22 = arith.addf %16, %21 : vector<2x128xf32>
    %23 = vector.extract_strided_slice %0 {offsets = [0, 3, 0, 0], sizes = [1, 1, 2, 128], strides = [1, 1, 1, 1]} : vector<1x4x2x128xf32> to vector<1x1x2x128xf32>
    %24 = vector.shape_cast %23 : vector<1x1x2x128xf32> to vector<2x128xf32>
    %c3 = arith.constant 3 : index
    %25 = memref.load %arg3[%c3] : memref<4xf32, #tpu.memory_space<smem>>
    %26 = vector.broadcast %25 : f32 to vector<2x128xf32>
    %27 = arith.mulf %24, %26 : vector<2x128xf32>
    %28 = arith.addf %22, %27 : vector<2x128xf32>
    %cst_5 = arith.constant 0.000000e+00 : f32
    %29 = vector.broadcast %cst_5 : f32 to vector<2x128xf32>
    %30 = arith.subf %29, %28 : vector<2x128xf32>
    %31 = math.exp %30 : vector<2x128xf32>
    %cst_6 = arith.constant 1.000000e+00 : f32
    %32 = vector.broadcast %cst_6 : f32 to vector<2x128xf32>
    %33 = arith.addf %32, %31 : vector<2x128xf32>
    %cst_7 = arith.constant 1.000000e+00 : f32
    %34 = vector.broadcast %cst_7 : f32 to vector<2x128xf32>
    %35 = arith.divf %34, %33 : vector<2x128xf32>
    %c0_8 = arith.constant 0 : index
    %c0_9 = arith.constant 0 : index
    %c0_10 = arith.constant 0 : index
    %c0_11 = arith.constant 0 : index
    %36 = vector.load %arg5[%c0_8, %c0_9, %c0_10, %c0_11] : memref<1x1x2x128xf32, #tpu.memory_space<vmem>>, vector<1x1x2x128xf32>
    %37 = vector.shape_cast %36 : vector<1x1x2x128xf32> to vector<2x128xf32>
    %38 = vector.shape_cast %35 : vector<2x128xf32> to vector<1x1x2x128xf32>
    tpu.vector_store %arg5[%c0_8, %c0_9, %c0_10, %c0_11], %38 {strides = array<i32>} : memref<1x1x2x128xf32, #tpu.memory_space<vmem>>, vector<1x1x2x128xf32>,
    return
  }
  func.func @transform_0(%arg0: i32, %arg1: i32) -> (i32, i32, i32, i32) {
    %c0_i32 = arith.constant 0 : i32
    %c0_i32_0 = arith.constant 0 : i32
    %c0_i32_1 = arith.constant 0 : i32
    return %arg0, %c0_i32, %arg1, %c0_i32_0 : i32, i32, i32, i32
  }
  func.func @transform_1(%arg0: i32, %arg1: i32) -> i32 {
    %c0_i32 = arith.constant 0 : i32
    %c0_i32_0 = arith.constant 0 : i32
    return %c0_i32 : i32
  }
  func.func @transform_2(%arg0: i32, %arg1: i32) -> i32 {
    %c0_i32 = arith.constant 0 : i32
    %c0_i32_0 = arith.constant 0 : i32
    return %c0_i32 : i32
  }
  func.func @transform_3(%arg0: i32, %arg1: i32) -> (i32, i32, i32, i32) {
    %c0_i32 = arith.constant 0 : i32
    %c0_i32_0 = arith.constant 0 : i32
    %c0_i32_1 = arith.constant 0 : i32
    return %arg0, %c0_i32, %arg1, %c0_i32_0 : i32, i32, i32, i32
  }
}

module attributes {stable_mosaic.version = 11 : i64} {
  func.func @_conv3x3_sigmoid_flat_kernel(%arg0: i32, %arg1: memref<1x1x128xf32, #tpu.memory_space<vmem>>, %arg2: memref<9xf32, #tpu.memory_space<smem>>, %arg3: memref<1xf32, #tpu.memory_space<smem>>, %arg4: memref<1x1x128xf32, #tpu.memory_space<vmem>>, %arg5: memref<1x1x128xf32, #tpu.memory_space<vmem>>) attributes {dimension_semantics = [#tpu.dimension_semantics<parallel>], iteration_bounds = array<i64: 2>, scalar_prefetch = 0 : i64, scratch_operands = 0 : i64, tpu.core_type = #tpu.core_type<tc>, window_params = [{transform_indices = @transform_0, window_bounds = array<i64: 1, 1, 128>}, {transform_indices = @transform_1, window_bounds = array<i64: 9>}, {transform_indices = @transform_2, window_bounds = array<i64: 1>}, {transform_indices = @transform_3, window_bounds = array<i64: 1, 1, 128>}, {transform_indices = @transform_4, window_bounds = array<i64: 1, 1, 128>}]} {
    %c0 = arith.constant 0 : index
    %c0_0 = arith.constant 0 : index
    %c0_1 = arith.constant 0 : index
    %0 = vector.load %arg1[%c0, %c0_0, %c0_1] : memref<1x1x128xf32, #tpu.memory_space<vmem>>, vector<1x1x128xf32>
    %1 = vector.shape_cast %0 : vector<1x1x128xf32> to vector<1x128xf32>
    %2 = tpu.iota {dimensions = array<i32: 1>} : vector<1x128xi32>
    %3 = tpu.iota {dimensions = array<i32: 0>} : vector<1x128xi32>
    %c128_i32 = arith.constant 128 : i32
    %4 = vector.broadcast %c128_i32 : i32 to vector<1x128xi32>
    %5 = arith.muli %3, %4 : vector<1x128xi32>
    %6 = arith.addi %5, %2 : vector<1x128xi32>
    %c7_i32 = arith.constant 7 : i32
    %7 = vector.broadcast %c7_i32 : i32 to vector<1x128xi32>
    %8 = arith.andi %2, %7 : vector<1x128xi32>
    %cst = arith.constant 0.000000e+00 : f32
    %9 = vector.broadcast %cst : f32 to vector<1x128xf32>
    %c0_2 = arith.constant 0 : index
    %10 = memref.load %arg3[%c0_2] : memref<1xf32, #tpu.memory_space<smem>>
    %11 = vector.broadcast %10 : f32 to vector<1x128xf32>
    %12 = arith.addf %9, %11 : vector<1x128xf32>
    %c0_3 = arith.constant 0 : index
    %13 = memref.load %arg2[%c0_3] : memref<9xf32, #tpu.memory_space<smem>>
    %c9_i32 = arith.constant 9 : i32
    %14 = tpu.dynamic_rotate %1 by %c9_i32 dim 1 : vector<1x128xf32>, i32 -> vector<1x128xf32>
    %c8_i32 = arith.constant 8 : i32
    %15 = vector.broadcast %c8_i32 : i32 to vector<1x128xi32>
    %16 = arith.cmpi sge, %6, %15 : vector<1x128xi32>
    %c0_i32 = arith.constant 0 : i32
    %17 = vector.broadcast %c0_i32 : i32 to vector<1x128xi32>
    %18 = arith.cmpi ne, %8, %17 : vector<1x128xi32>
    %19 = arith.andi %16, %18 : vector<1x128xi1>
    %cst_4 = arith.constant 0.000000e+00 : f32
    %20 = vector.broadcast %cst_4 : f32 to vector<1x128xf32>
    %21 = arith.select %19, %14, %20 : vector<1x128xi1>, vector<1x128xf32>
    %22 = vector.broadcast %13 : f32 to vector<1x128xf32>
    %23 = arith.mulf %21, %22 : vector<1x128xf32>
    %24 = arith.addf %12, %23 : vector<1x128xf32>
    %c1 = arith.constant 1 : index
    %25 = memref.load %arg2[%c1] : memref<9xf32, #tpu.memory_space<smem>>
    %c8_i32_5 = arith.constant 8 : i32
    %26 = tpu.dynamic_rotate %1 by %c8_i32_5 dim 1 : vector<1x128xf32>, i32 -> vector<1x128xf32>
    %c8_i32_6 = arith.constant 8 : i32
    %27 = vector.broadcast %c8_i32_6 : i32 to vector<1x128xi32>
    %28 = arith.cmpi sge, %6, %27 : vector<1x128xi32>
    %cst_7 = arith.constant 0.000000e+00 : f32
    %29 = vector.broadcast %cst_7 : f32 to vector<1x128xf32>
    %30 = arith.select %28, %26, %29 : vector<1x128xi1>, vector<1x128xf32>
    %31 = vector.broadcast %25 : f32 to vector<1x128xf32>
    %32 = arith.mulf %30, %31 : vector<1x128xf32>
    %33 = arith.addf %24, %32 : vector<1x128xf32>
    %c2 = arith.constant 2 : index
    %34 = memref.load %arg2[%c2] : memref<9xf32, #tpu.memory_space<smem>>
    %c7_i32_8 = arith.constant 7 : i32
    %35 = tpu.dynamic_rotate %1 by %c7_i32_8 dim 1 : vector<1x128xf32>, i32 -> vector<1x128xf32>
    %c8_i32_9 = arith.constant 8 : i32
    %36 = vector.broadcast %c8_i32_9 : i32 to vector<1x128xi32>
    %37 = arith.cmpi sge, %6, %36 : vector<1x128xi32>
    %c7_i32_10 = arith.constant 7 : i32
    %38 = vector.broadcast %c7_i32_10 : i32 to vector<1x128xi32>
    %39 = arith.cmpi ne, %8, %38 : vector<1x128xi32>
    %40 = arith.andi %37, %39 : vector<1x128xi1>
    %cst_11 = arith.constant 0.000000e+00 : f32
    %41 = vector.broadcast %cst_11 : f32 to vector<1x128xf32>
    %42 = arith.select %40, %35, %41 : vector<1x128xi1>, vector<1x128xf32>
    %43 = vector.broadcast %34 : f32 to vector<1x128xf32>
    %44 = arith.mulf %42, %43 : vector<1x128xf32>
    %45 = arith.addf %33, %44 : vector<1x128xf32>
    %c3 = arith.constant 3 : index
    %46 = memref.load %arg2[%c3] : memref<9xf32, #tpu.memory_space<smem>>
    %c1_i32 = arith.constant 1 : i32
    %47 = tpu.dynamic_rotate %1 by %c1_i32 dim 1 : vector<1x128xf32>, i32 -> vector<1x128xf32>
    %c0_i32_12 = arith.constant 0 : i32
    %48 = vector.broadcast %c0_i32_12 : i32 to vector<1x128xi32>
    %49 = arith.cmpi ne, %8, %48 : vector<1x128xi32>
    %cst_13 = arith.constant 0.000000e+00 : f32
    %50 = vector.broadcast %cst_13 : f32 to vector<1x128xf32>
    %51 = arith.select %49, %47, %50 : vector<1x128xi1>, vector<1x128xf32>
    %52 = vector.broadcast %46 : f32 to vector<1x128xf32>
    %53 = arith.mulf %51, %52 : vector<1x128xf32>
    %54 = arith.addf %45, %53 : vector<1x128xf32>
    %c4 = arith.constant 4 : index
    %55 = memref.load %arg2[%c4] : memref<9xf32, #tpu.memory_space<smem>>
    %56 = vector.broadcast %55 : f32 to vector<1x128xf32>
    %57 = arith.mulf %1, %56 : vector<1x128xf32>
    %58 = arith.addf %54, %57 : vector<1x128xf32>
    %c5 = arith.constant 5 : index
    %59 = memref.load %arg2[%c5] : memref<9xf32, #tpu.memory_space<smem>>
    %c127_i32 = arith.constant 127 : i32
    %60 = tpu.dynamic_rotate %1 by %c127_i32 dim 1 : vector<1x128xf32>, i32 -> vector<1x128xf32>
    %c7_i32_14 = arith.constant 7 : i32
    %61 = vector.broadcast %c7_i32_14 : i32 to vector<1x128xi32>
    %62 = arith.cmpi ne, %8, %61 : vector<1x128xi32>
    %cst_15 = arith.constant 0.000000e+00 : f32
    %63 = vector.broadcast %cst_15 : f32 to vector<1x128xf32>
    %64 = arith.select %62, %60, %63 : vector<1x128xi1>, vector<1x128xf32>
    %65 = vector.broadcast %59 : f32 to vector<1x128xf32>
    %66 = arith.mulf %64, %65 : vector<1x128xf32>
    %67 = arith.addf %58, %66 : vector<1x128xf32>
    %c6 = arith.constant 6 : index
    %68 = memref.load %arg2[%c6] : memref<9xf32, #tpu.memory_space<smem>>
    %c121_i32 = arith.constant 121 : i32
    %69 = tpu.dynamic_rotate %1 by %c121_i32 dim 1 : vector<1x128xf32>, i32 -> vector<1x128xf32>
    %c56_i32 = arith.constant 56 : i32
    %70 = vector.broadcast %c56_i32 : i32 to vector<1x128xi32>
    %71 = arith.cmpi slt, %6, %70 : vector<1x128xi32>
    %c0_i32_16 = arith.constant 0 : i32
    %72 = vector.broadcast %c0_i32_16 : i32 to vector<1x128xi32>
    %73 = arith.cmpi ne, %8, %72 : vector<1x128xi32>
    %74 = arith.andi %71, %73 : vector<1x128xi1>
    %cst_17 = arith.constant 0.000000e+00 : f32
    %75 = vector.broadcast %cst_17 : f32 to vector<1x128xf32>
    %76 = arith.select %74, %69, %75 : vector<1x128xi1>, vector<1x128xf32>
    %77 = vector.broadcast %68 : f32 to vector<1x128xf32>
    %78 = arith.mulf %76, %77 : vector<1x128xf32>
    %79 = arith.addf %67, %78 : vector<1x128xf32>
    %c7 = arith.constant 7 : index
    %80 = memref.load %arg2[%c7] : memref<9xf32, #tpu.memory_space<smem>>
    %c120_i32 = arith.constant 120 : i32
    %81 = tpu.dynamic_rotate %1 by %c120_i32 dim 1 : vector<1x128xf32>, i32 -> vector<1x128xf32>
    %c56_i32_18 = arith.constant 56 : i32
    %82 = vector.broadcast %c56_i32_18 : i32 to vector<1x128xi32>
    %83 = arith.cmpi slt, %6, %82 : vector<1x128xi32>
    %cst_19 = arith.constant 0.000000e+00 : f32
    %84 = vector.broadcast %cst_19 : f32 to vector<1x128xf32>
    %85 = arith.select %83, %81, %84 : vector<1x128xi1>, vector<1x128xf32>
    %86 = vector.broadcast %80 : f32 to vector<1x128xf32>
    %87 = arith.mulf %85, %86 : vector<1x128xf32>
    %88 = arith.addf %79, %87 : vector<1x128xf32>
    %c8 = arith.constant 8 : index
    %89 = memref.load %arg2[%c8] : memref<9xf32, #tpu.memory_space<smem>>
    %c119_i32 = arith.constant 119 : i32
    %90 = tpu.dynamic_rotate %1 by %c119_i32 dim 1 : vector<1x128xf32>, i32 -> vector<1x128xf32>
    %c56_i32_20 = arith.constant 56 : i32
    %91 = vector.broadcast %c56_i32_20 : i32 to vector<1x128xi32>
    %92 = arith.cmpi slt, %6, %91 : vector<1x128xi32>
    %c7_i32_21 = arith.constant 7 : i32
    %93 = vector.broadcast %c7_i32_21 : i32 to vector<1x128xi32>
    %94 = arith.cmpi ne, %8, %93 : vector<1x128xi32>
    %95 = arith.andi %92, %94 : vector<1x128xi1>
    %cst_22 = arith.constant 0.000000e+00 : f32
    %96 = vector.broadcast %cst_22 : f32 to vector<1x128xf32>
    %97 = arith.select %95, %90, %96 : vector<1x128xi1>, vector<1x128xf32>
    %98 = vector.broadcast %89 : f32 to vector<1x128xf32>
    %99 = arith.mulf %97, %98 : vector<1x128xf32>
    %100 = arith.addf %88, %99 : vector<1x128xf32>
    %c0_23 = arith.constant 0 : index
    %c0_24 = arith.constant 0 : index
    %c0_25 = arith.constant 0 : index
    %101 = vector.load %arg5[%c0_23, %c0_24, %c0_25] : memref<1x1x128xf32, #tpu.memory_space<vmem>>, vector<1x1x128xf32>
    %102 = vector.shape_cast %101 : vector<1x1x128xf32> to vector<1x128xf32>
    %103 = vector.shape_cast %100 : vector<1x128xf32> to vector<1x1x128xf32>
    tpu.vector_store %arg5[%c0_23, %c0_24, %c0_25], %103 {strides = array<i32>} : memref<1x1x128xf32, #tpu.memory_space<vmem>>, vector<1x1x128xf32>,
    %cst_26 = arith.constant 0.000000e+00 : f32
    %104 = vector.broadcast %cst_26 : f32 to vector<1x128xf32>
    %105 = arith.subf %104, %100 : vector<1x128xf32>
    %106 = math.exp %105 : vector<1x128xf32>
    %cst_27 = arith.constant 1.000000e+00 : f32
    %107 = vector.broadcast %cst_27 : f32 to vector<1x128xf32>
    %108 = arith.addf %107, %106 : vector<1x128xf32>
    %cst_28 = arith.constant 1.000000e+00 : f32
    %109 = vector.broadcast %cst_28 : f32 to vector<1x128xf32>
    %110 = arith.divf %109, %108 : vector<1x128xf32>
    %c0_29 = arith.constant 0 : index
    %c0_30 = arith.constant 0 : index
    %c0_31 = arith.constant 0 : index
    %111 = vector.load %arg4[%c0_29, %c0_30, %c0_31] : memref<1x1x128xf32, #tpu.memory_space<vmem>>, vector<1x1x128xf32>
    %112 = vector.shape_cast %111 : vector<1x1x128xf32> to vector<1x128xf32>
    %113 = vector.shape_cast %110 : vector<1x128xf32> to vector<1x1x128xf32>
    tpu.vector_store %arg4[%c0_29, %c0_30, %c0_31], %113 {strides = array<i32>} : memref<1x1x128xf32, #tpu.memory_space<vmem>>, vector<1x1x128xf32>,
    return
  }
  func.func @transform_0(%arg0: i32) -> (i32, i32, i32) {
    %c0_i32 = arith.constant 0 : i32
    %c0_i32_0 = arith.constant 0 : i32
    %c0_i32_1 = arith.constant 0 : i32
    return %arg0, %c0_i32, %c0_i32_0 : i32, i32, i32
  }
  func.func @transform_1(%arg0: i32) -> i32 {
    %c0_i32 = arith.constant 0 : i32
    %c0_i32_0 = arith.constant 0 : i32
    return %c0_i32 : i32
  }
  func.func @transform_2(%arg0: i32) -> i32 {
    %c0_i32 = arith.constant 0 : i32
    %c0_i32_0 = arith.constant 0 : i32
    return %c0_i32 : i32
  }
  func.func @transform_3(%arg0: i32) -> (i32, i32, i32) {
    %c0_i32 = arith.constant 0 : i32
    %c0_i32_0 = arith.constant 0 : i32
    %c0_i32_1 = arith.constant 0 : i32
    return %arg0, %c0_i32, %c0_i32_0 : i32, i32, i32
  }
  func.func @transform_4(%arg0: i32) -> (i32, i32, i32) {
    %c0_i32 = arith.constant 0 : i32
    %c0_i32_0 = arith.constant 0 : i32
    %c0_i32_1 = arith.constant 0 : i32
    return %arg0, %c0_i32, %c0_i32_0 : i32, i32, i32
  }
}

module attributes {stable_mosaic.version = 11 : i64} {
  func.func @_conv3x3_sigmoid_flat_kernel(%arg0: i32, %arg1: memref<1x1x128xf32, #tpu.memory_space<vmem>>, %arg2: memref<9xf32, #tpu.memory_space<smem>>, %arg3: memref<1xf32, #tpu.memory_space<smem>>, %arg4: memref<1x1x128xf32, #tpu.memory_space<vmem>>) attributes {dimension_semantics = [#tpu.dimension_semantics<parallel>], iteration_bounds = array<i64: 2>, scalar_prefetch = 0 : i64, scratch_operands = 0 : i64, tpu.core_type = #tpu.core_type<tc>, window_params = [{transform_indices = @transform_0, window_bounds = array<i64: 1, 1, 128>}, {transform_indices = @transform_1, window_bounds = array<i64: 9>}, {transform_indices = @transform_2, window_bounds = array<i64: 1>}, {transform_indices = @transform_3, window_bounds = array<i64: 1, 1, 128>}]} {
    %c0 = arith.constant 0 : index
    %c0_0 = arith.constant 0 : index
    %c0_1 = arith.constant 0 : index
    %0 = vector.load %arg1[%c0, %c0_0, %c0_1] : memref<1x1x128xf32, #tpu.memory_space<vmem>>, vector<1x1x128xf32>
    %1 = vector.shape_cast %0 : vector<1x1x128xf32> to vector<1x128xf32>
    %2 = tpu.iota {dimensions = array<i32: 1>} : vector<1x128xi32>
    %3 = tpu.iota {dimensions = array<i32: 0>} : vector<1x128xi32>
    %c128_i32 = arith.constant 128 : i32
    %4 = vector.broadcast %c128_i32 : i32 to vector<1x128xi32>
    %5 = arith.muli %3, %4 : vector<1x128xi32>
    %6 = arith.addi %5, %2 : vector<1x128xi32>
    %c3_i32 = arith.constant 3 : i32
    %7 = vector.broadcast %c3_i32 : i32 to vector<1x128xi32>
    %8 = arith.andi %2, %7 : vector<1x128xi32>
    %cst = arith.constant 0.000000e+00 : f32
    %9 = vector.broadcast %cst : f32 to vector<1x128xf32>
    %c0_2 = arith.constant 0 : index
    %10 = memref.load %arg3[%c0_2] : memref<1xf32, #tpu.memory_space<smem>>
    %11 = vector.broadcast %10 : f32 to vector<1x128xf32>
    %12 = arith.addf %9, %11 : vector<1x128xf32>
    %c0_3 = arith.constant 0 : index
    %13 = memref.load %arg2[%c0_3] : memref<9xf32, #tpu.memory_space<smem>>
    %c5_i32 = arith.constant 5 : i32
    %14 = tpu.dynamic_rotate %1 by %c5_i32 dim 1 : vector<1x128xf32>, i32 -> vector<1x128xf32>
    %c4_i32 = arith.constant 4 : i32
    %15 = vector.broadcast %c4_i32 : i32 to vector<1x128xi32>
    %16 = arith.cmpi sge, %6, %15 : vector<1x128xi32>
    %c0_i32 = arith.constant 0 : i32
    %17 = vector.broadcast %c0_i32 : i32 to vector<1x128xi32>
    %18 = arith.cmpi ne, %8, %17 : vector<1x128xi32>
    %19 = arith.andi %16, %18 : vector<1x128xi1>
    %cst_4 = arith.constant 0.000000e+00 : f32
    %20 = vector.broadcast %cst_4 : f32 to vector<1x128xf32>
    %21 = arith.select %19, %14, %20 : vector<1x128xi1>, vector<1x128xf32>
    %22 = vector.broadcast %13 : f32 to vector<1x128xf32>
    %23 = arith.mulf %21, %22 : vector<1x128xf32>
    %24 = arith.addf %12, %23 : vector<1x128xf32>
    %c1 = arith.constant 1 : index
    %25 = memref.load %arg2[%c1] : memref<9xf32, #tpu.memory_space<smem>>
    %c4_i32_5 = arith.constant 4 : i32
    %26 = tpu.dynamic_rotate %1 by %c4_i32_5 dim 1 : vector<1x128xf32>, i32 -> vector<1x128xf32>
    %c4_i32_6 = arith.constant 4 : i32
    %27 = vector.broadcast %c4_i32_6 : i32 to vector<1x128xi32>
    %28 = arith.cmpi sge, %6, %27 : vector<1x128xi32>
    %cst_7 = arith.constant 0.000000e+00 : f32
    %29 = vector.broadcast %cst_7 : f32 to vector<1x128xf32>
    %30 = arith.select %28, %26, %29 : vector<1x128xi1>, vector<1x128xf32>
    %31 = vector.broadcast %25 : f32 to vector<1x128xf32>
    %32 = arith.mulf %30, %31 : vector<1x128xf32>
    %33 = arith.addf %24, %32 : vector<1x128xf32>
    %c2 = arith.constant 2 : index
    %34 = memref.load %arg2[%c2] : memref<9xf32, #tpu.memory_space<smem>>
    %c3_i32_8 = arith.constant 3 : i32
    %35 = tpu.dynamic_rotate %1 by %c3_i32_8 dim 1 : vector<1x128xf32>, i32 -> vector<1x128xf32>
    %c4_i32_9 = arith.constant 4 : i32
    %36 = vector.broadcast %c4_i32_9 : i32 to vector<1x128xi32>
    %37 = arith.cmpi sge, %6, %36 : vector<1x128xi32>
    %c3_i32_10 = arith.constant 3 : i32
    %38 = vector.broadcast %c3_i32_10 : i32 to vector<1x128xi32>
    %39 = arith.cmpi ne, %8, %38 : vector<1x128xi32>
    %40 = arith.andi %37, %39 : vector<1x128xi1>
    %cst_11 = arith.constant 0.000000e+00 : f32
    %41 = vector.broadcast %cst_11 : f32 to vector<1x128xf32>
    %42 = arith.select %40, %35, %41 : vector<1x128xi1>, vector<1x128xf32>
    %43 = vector.broadcast %34 : f32 to vector<1x128xf32>
    %44 = arith.mulf %42, %43 : vector<1x128xf32>
    %45 = arith.addf %33, %44 : vector<1x128xf32>
    %c3 = arith.constant 3 : index
    %46 = memref.load %arg2[%c3] : memref<9xf32, #tpu.memory_space<smem>>
    %c1_i32 = arith.constant 1 : i32
    %47 = tpu.dynamic_rotate %1 by %c1_i32 dim 1 : vector<1x128xf32>, i32 -> vector<1x128xf32>
    %c0_i32_12 = arith.constant 0 : i32
    %48 = vector.broadcast %c0_i32_12 : i32 to vector<1x128xi32>
    %49 = arith.cmpi ne, %8, %48 : vector<1x128xi32>
    %cst_13 = arith.constant 0.000000e+00 : f32
    %50 = vector.broadcast %cst_13 : f32 to vector<1x128xf32>
    %51 = arith.select %49, %47, %50 : vector<1x128xi1>, vector<1x128xf32>
    %52 = vector.broadcast %46 : f32 to vector<1x128xf32>
    %53 = arith.mulf %51, %52 : vector<1x128xf32>
    %54 = arith.addf %45, %53 : vector<1x128xf32>
    %c4 = arith.constant 4 : index
    %55 = memref.load %arg2[%c4] : memref<9xf32, #tpu.memory_space<smem>>
    %56 = vector.broadcast %55 : f32 to vector<1x128xf32>
    %57 = arith.mulf %1, %56 : vector<1x128xf32>
    %58 = arith.addf %54, %57 : vector<1x128xf32>
    %c5 = arith.constant 5 : index
    %59 = memref.load %arg2[%c5] : memref<9xf32, #tpu.memory_space<smem>>
    %c127_i32 = arith.constant 127 : i32
    %60 = tpu.dynamic_rotate %1 by %c127_i32 dim 1 : vector<1x128xf32>, i32 -> vector<1x128xf32>
    %c3_i32_14 = arith.constant 3 : i32
    %61 = vector.broadcast %c3_i32_14 : i32 to vector<1x128xi32>
    %62 = arith.cmpi ne, %8, %61 : vector<1x128xi32>
    %cst_15 = arith.constant 0.000000e+00 : f32
    %63 = vector.broadcast %cst_15 : f32 to vector<1x128xf32>
    %64 = arith.select %62, %60, %63 : vector<1x128xi1>, vector<1x128xf32>
    %65 = vector.broadcast %59 : f32 to vector<1x128xf32>
    %66 = arith.mulf %64, %65 : vector<1x128xf32>
    %67 = arith.addf %58, %66 : vector<1x128xf32>
    %c6 = arith.constant 6 : index
    %68 = memref.load %arg2[%c6] : memref<9xf32, #tpu.memory_space<smem>>
    %c125_i32 = arith.constant 125 : i32
    %69 = tpu.dynamic_rotate %1 by %c125_i32 dim 1 : vector<1x128xf32>, i32 -> vector<1x128xf32>
    %c12_i32 = arith.constant 12 : i32
    %70 = vector.broadcast %c12_i32 : i32 to vector<1x128xi32>
    %71 = arith.cmpi slt, %6, %70 : vector<1x128xi32>
    %c0_i32_16 = arith.constant 0 : i32
    %72 = vector.broadcast %c0_i32_16 : i32 to vector<1x128xi32>
    %73 = arith.cmpi ne, %8, %72 : vector<1x128xi32>
    %74 = arith.andi %71, %73 : vector<1x128xi1>
    %cst_17 = arith.constant 0.000000e+00 : f32
    %75 = vector.broadcast %cst_17 : f32 to vector<1x128xf32>
    %76 = arith.select %74, %69, %75 : vector<1x128xi1>, vector<1x128xf32>
    %77 = vector.broadcast %68 : f32 to vector<1x128xf32>
    %78 = arith.mulf %76, %77 : vector<1x128xf32>
    %79 = arith.addf %67, %78 : vector<1x128xf32>
    %c7 = arith.constant 7 : index
    %80 = memref.load %arg2[%c7] : memref<9xf32, #tpu.memory_space<smem>>
    %c124_i32 = arith.constant 124 : i32
    %81 = tpu.dynamic_rotate %1 by %c124_i32 dim 1 : vector<1x128xf32>, i32 -> vector<1x128xf32>
    %c12_i32_18 = arith.constant 12 : i32
    %82 = vector.broadcast %c12_i32_18 : i32 to vector<1x128xi32>
    %83 = arith.cmpi slt, %6, %82 : vector<1x128xi32>
    %cst_19 = arith.constant 0.000000e+00 : f32
    %84 = vector.broadcast %cst_19 : f32 to vector<1x128xf32>
    %85 = arith.select %83, %81, %84 : vector<1x128xi1>, vector<1x128xf32>
    %86 = vector.broadcast %80 : f32 to vector<1x128xf32>
    %87 = arith.mulf %85, %86 : vector<1x128xf32>
    %88 = arith.addf %79, %87 : vector<1x128xf32>
    %c8 = arith.constant 8 : index
    %89 = memref.load %arg2[%c8] : memref<9xf32, #tpu.memory_space<smem>>
    %c123_i32 = arith.constant 123 : i32
    %90 = tpu.dynamic_rotate %1 by %c123_i32 dim 1 : vector<1x128xf32>, i32 -> vector<1x128xf32>
    %c12_i32_20 = arith.constant 12 : i32
    %91 = vector.broadcast %c12_i32_20 : i32 to vector<1x128xi32>
    %92 = arith.cmpi slt, %6, %91 : vector<1x128xi32>
    %c3_i32_21 = arith.constant 3 : i32
    %93 = vector.broadcast %c3_i32_21 : i32 to vector<1x128xi32>
    %94 = arith.cmpi ne, %8, %93 : vector<1x128xi32>
    %95 = arith.andi %92, %94 : vector<1x128xi1>
    %cst_22 = arith.constant 0.000000e+00 : f32
    %96 = vector.broadcast %cst_22 : f32 to vector<1x128xf32>
    %97 = arith.select %95, %90, %96 : vector<1x128xi1>, vector<1x128xf32>
    %98 = vector.broadcast %89 : f32 to vector<1x128xf32>
    %99 = arith.mulf %97, %98 : vector<1x128xf32>
    %100 = arith.addf %88, %99 : vector<1x128xf32>
    %cst_23 = arith.constant 0.000000e+00 : f32
    %101 = vector.broadcast %cst_23 : f32 to vector<1x128xf32>
    %102 = arith.subf %101, %100 : vector<1x128xf32>
    %103 = math.exp %102 : vector<1x128xf32>
    %cst_24 = arith.constant 1.000000e+00 : f32
    %104 = vector.broadcast %cst_24 : f32 to vector<1x128xf32>
    %105 = arith.addf %104, %103 : vector<1x128xf32>
    %cst_25 = arith.constant 1.000000e+00 : f32
    %106 = vector.broadcast %cst_25 : f32 to vector<1x128xf32>
    %107 = arith.divf %106, %105 : vector<1x128xf32>
    %c0_26 = arith.constant 0 : index
    %c0_27 = arith.constant 0 : index
    %c0_28 = arith.constant 0 : index
    %108 = vector.load %arg4[%c0_26, %c0_27, %c0_28] : memref<1x1x128xf32, #tpu.memory_space<vmem>>, vector<1x1x128xf32>
    %109 = vector.shape_cast %108 : vector<1x1x128xf32> to vector<1x128xf32>
    %110 = vector.shape_cast %107 : vector<1x128xf32> to vector<1x1x128xf32>
    tpu.vector_store %arg4[%c0_26, %c0_27, %c0_28], %110 {strides = array<i32>} : memref<1x1x128xf32, #tpu.memory_space<vmem>>, vector<1x1x128xf32>,
    return
  }
  func.func @transform_0(%arg0: i32) -> (i32, i32, i32) {
    %c0_i32 = arith.constant 0 : i32
    %c0_i32_0 = arith.constant 0 : i32
    %c0_i32_1 = arith.constant 0 : i32
    return %arg0, %c0_i32, %c0_i32_0 : i32, i32, i32
  }
  func.func @transform_1(%arg0: i32) -> i32 {
    %c0_i32 = arith.constant 0 : i32
    %c0_i32_0 = arith.constant 0 : i32
    return %c0_i32 : i32
  }
  func.func @transform_2(%arg0: i32) -> i32 {
    %c0_i32 = arith.constant 0 : i32
    %c0_i32_0 = arith.constant 0 : i32
    return %c0_i32 : i32
  }
  func.func @transform_3(%arg0: i32) -> (i32, i32, i32) {
    %c0_i32 = arith.constant 0 : i32
    %c0_i32_0 = arith.constant 0 : i32
    %c0_i32_1 = arith.constant 0 : i32
    return %arg0, %c0_i32, %c0_i32_0 : i32, i32, i32
  }
}

</mosaic_0001>

<llo_original>
// kernel: multiscale_extension_pyramid_forward.4
$region0: #{multiscale_extension_pyramid_forward.4}
  #allocation0 [shape = 'u32[]', space=smem, size = 0x4, offset = 0x4, fixed_abs, tag = 'smem constant byte address 0x4 - core index']
  #allocation1 [shape = 'u32[72,128]{1,0:T(1,128)}', space=vmem, size = 0x9000, scoped, tag = 'internal scratch']
  #allocation2 [shape = 'f32[1]{0:T(128)S(6)}', space=smem, size = 0x200, scoped, tag = 'scoped memory for multiscale_extension_pyramid_forward.4']
  %s0 = inlined_call_operand.vmem [shape: f32[2,1,128], index: 0, kind: input, shape index: {}]
  %s1 = inlined_call_operand.vmem [shape: f32[9], index: 1, kind: input, shape index: {}]
  %s2 = inlined_call_operand.<no memory space> [shape: f32[1], index: 2, kind: input, shape index: {}]
  %s3 = inlined_call_operand.vmem [shape: f32[2,1,128], index: 3, kind: output, shape index: {0}]
  %s4 = inlined_call_operand.vmem [shape: f32[2,1,128], index: 4, kind: output, shape index: {1}]
  %5 = xla_tuple %s3, %s4
  %s6 = sld [smem:[#allocation0]]
  $region57: #{multiscale_extension_pyramid_forward.4} parent=0
    _
  %s8 = ssub.s32 1, %s6
  %s9 = scalar_select 0, %s8, %s6
  %10 = sst [smem:[#allocation2]] %s2
  $region1: #{multiscale_extension_pyramid_forward.4} parent=0
    #allocation3 [shape = 'u8[512]{0}', space=smem, size = 0x200, scoped, tag = 'input window, operand 1, single buffered']
    #allocation4 [shape = 's32[2]{0}', space=sflag, size = 0x8, scoped, tag = 'scoped memory for multiscale_extension_pyramid_forward.4']
    %11 = vsyncpa [#allocation4], 0
    loop: start=0, step=1, limit=4
    $region2: #{multiscale_extension_pyramid_forward.4} parent=1 // loop_pre_header
      _
    $region3: #{multiscale_extension_pyramid_forward.4} parent=1 // loop_header
      %s13 = sphi 0, %s17
      %p14 = scmp.ge.s32.totalorder %s13, 4
      %s23 = sphi 0, %s25
      %s26 = sphi 0, %s23
      %s27 = sphi 0, %s26
      %s43 = sphi 0, %s27
      %s47 = sphi 0, %s47
      %s49 = sphi 0, %s47
      %s50 = sphi 0, %s49
      %s64 = sphi 0, %s50
      %s68 = sphi 0, %s68
      %s70 = sphi 0, %s68
      %s71 = sphi 0, %s70
      %s85 = sphi 0, %s71
      %s91 = sphi 0, %s93
      %s94 = sphi 0, %s91
      %s95 = sphi 0, %s94
      %s111 = sphi 0, %s95
      %s117 = sphi 0, %s119
      %s120 = sphi 0, %s117
      %s121 = sphi 0, %s120
      %s137 = sphi 0, %s121
    $region4: #{multiscale_extension_pyramid_forward.4} parent=1 // loop_header_branch
      %16 = sbr.rel (%p14) target = $region8
    $region5: #{multiscale_extension_pyramid_forward.4} parent=1 // loop_body
      %s18 = ssub.s32 %s13, 1
      %s19 = ssub.s32 %s13, 2
      %s20 = sadd.s32 %s13, 1
      %s21 = ssub.s32 %s13, %s20
      %p22 = scmp.eq.s32.totalorder %s21, 0
      %s24 = sadd.s32 %s23, 1
      %s25 = scalar_select %p22, %s23, %s24
      %p28 = pneg %p22
      %p29 = scmp.eq.s32.totalorder %s13, 1
      %p30 = por %p28, %p29
      %p31 = scmp.ne.s32.totalorder %s23, %s26
      %p32 = scmp.eq.s32.totalorder %s13, 0
      %p33 = por %p31, %p32
      %p34 = scmp.ne.s32.totalorder %s23, %s26
      %p35 = scmp.eq.s32.totalorder %s18, 1
      %p36 = por %p34, %p35
      %p37 = scmp.ne.s32.totalorder %s26, %s27
      %p38 = scmp.eq.s32.totalorder %s18, 0
      %p39 = por %p37, %p38
      %p40 = scmp.ne.s32.totalorder %s26, %s27
      %p41 = scmp.eq.s32.totalorder %s19, 1
      %p42 = por %p40, %p41
      %p44 = scmp.ne.s32.totalorder %s27, %s43
      %p45 = scmp.eq.s32.totalorder %s19, 0
      %p46 = por %p44, %p45
      %s48 = sadd.s32 %s47, 1
      %p51 = scmp.eq.s32.totalorder %s13, 1
      %p52 = scmp.ne.s32.totalorder %s47, %s49
      %p53 = scmp.eq.s32.totalorder %s13, 0
      %p54 = por %p52, %p53
      %p55 = scmp.ne.s32.totalorder %s47, %s49
      %p56 = scmp.eq.s32.totalorder %s18, 1
      %p57 = por %p55, %p56
      %p58 = scmp.ne.s32.totalorder %s49, %s50
      %p59 = scmp.eq.s32.totalorder %s18, 0
      %p60 = por %p58, %p59
      %p61 = scmp.ne.s32.totalorder %s49, %s50
      %p62 = scmp.eq.s32.totalorder %s19, 1
      %p63 = por %p61, %p62
      %p65 = scmp.ne.s32.totalorder %s50, %s64
      %p66 = scmp.eq.s32.totalorder %s19, 0
      %p67 = por %p65, %p66
      %s69 = sadd.s32 %s68, 1
      %p72 = scmp.eq.s32.totalorder %s13, 1
      %p73 = scmp.ne.s32.totalorder %s68, %s70
      %p74 = scmp.eq.s32.totalorder %s13, 0
      %p75 = por %p73, %p74
      %p76 = scmp.ne.s32.totalorder %s68, %s70
      %p77 = scmp.eq.s32.totalorder %s18, 1
      %p78 = por %p76, %p77
      %p79 = scmp.ne.s32.totalorder %s70, %s71
      %p80 = scmp.eq.s32.totalorder %s18, 0
      %p81 = por %p79, %p80
      %p82 = scmp.ne.s32.totalorder %s70, %s71
      %p83 = scmp.eq.s32.totalorder %s19, 1
      %p84 = por %p82, %p83
      %p86 = scmp.ne.s32.totalorder %s71, %s85
      %p87 = scmp.eq.s32.totalorder %s19, 0
      %p88 = por %p86, %p87
      %s89 = ssub.s32 %s13, %s20
      %p90 = scmp.eq.s32.totalorder %s89, 0
      %s92 = sadd.s32 %s91, 1
      %s93 = scalar_select %p90, %s91, %s92
      %p96 = pneg %p90
      %p97 = scmp.eq.s32.totalorder %s13, 1
      %p98 = por %p96, %p97
      %p99 = scmp.ne.s32.totalorder %s91, %s94
      %p100 = scmp.eq.s32.totalorder %s13, 0
      %p101 = por %p99, %p100
      %p102 = scmp.ne.s32.totalorder %s91, %s94
      %p103 = scmp.eq.s32.totalorder %s18, 1
      %p104 = por %p102, %p103
      %p105 = scmp.ne.s32.totalorder %s94, %s95
      %p106 = scmp.eq.s32.totalorder %s18, 0
      %p107 = por %p105, %p106
      %p108 = scmp.ne.s32.totalorder %s94, %s95
      %p109 = scmp.eq.s32.totalorder %s19, 1
      %p110 = por %p108, %p109
      %p112 = scmp.ne.s32.totalorder %s95, %s111
      %p113 = scmp.eq.s32.totalorder %s19, 0
      %p114 = por %p112, %p113
      %s115 = ssub.s32 %s13, %s20
      %p116 = scmp.eq.s32.totalorder %s115, 0
      %s118 = sadd.s32 %s117, 1
      %s119 = scalar_select %p116, %s117, %s118
      %p122 = pneg %p116
      %p123 = scmp.eq.s32.totalorder %s13, 1
      %p124 = por %p122, %p123
      %p125 = scmp.ne.s32.totalorder %s117, %s120
      %p126 = scmp.eq.s32.totalorder %s13, 0
      %p127 = por %p125, %p126
      %p128 = scmp.ne.s32.totalorder %s117, %s120
      %p129 = scmp.eq.s32.totalorder %s18, 1
      %p130 = por %p128, %p129
      %p131 = scmp.ne.s32.totalorder %s120, %s121
      %p132 = scmp.eq.s32.totalorder %s18, 0
      %p133 = por %p131, %p132
      %p134 = scmp.ne.s32.totalorder %s120, %s121
      %p135 = scmp.eq.s32.totalorder %s19, 1
      %p136 = por %p134, %p135
      %p138 = scmp.ne.s32.totalorder %s121, %s137
      %p139 = scmp.eq.s32.totalorder %s19, 0
      %p140 = por %p138, %p139
      %p141 = scmp.le.s32.totalorder 1, %s13
      %p142 = scmp.lt.s32.totalorder %s13, 3
      %p143 = pnand %p141, %p142
      %p144 = pneg %p143
      // Predicated region
      $region9: #{multiscale_extension_pyramid_forward.4} parent=5 // pred_check
        _
      $region10: #{multiscale_extension_pyramid_forward.4} parent=5 // pred_check_branch
        %146 = sbr.rel (%p143) target = $region12
      $region11: #{multiscale_extension_pyramid_forward.4} parent=5 // pred_region
        %s147 = ssub.s32 %s13, 1
        // Predicated region
        $region13: #{multiscale_extension_pyramid_forward.4} parent=11 // pred_check
          %p148 = pneg %p60
        $region14: #{multiscale_extension_pyramid_forward.4} parent=11 // pred_check_branch
          %150 = sbr.rel (%p148) target = $region16
        $region15: #{multiscale_extension_pyramid_forward.4} parent=11 // pred_region
          %152 = vsyncadd [#allocation4], 0
          %s154 = sshll.u32 %s1, 4
          %s155 = int_to_ptr.vmem [resolvable:$true] %s154
          %157 = dma.vmem_to_smem %s155, 16, [#allocation3], [#allocation4]
        $region16: #{multiscale_extension_pyramid_forward.4} parent=11 // pred_fallthru
          _
        // Predicated region
        $region17: #{multiscale_extension_pyramid_forward.4} parent=11 // pred_check
          %p158 = pneg %p81
        $region18: #{multiscale_extension_pyramid_forward.4} parent=11 // pred_check_branch
          %160 = sbr.rel (%p158) target = $region20
        $region19: #{multiscale_extension_pyramid_forward.4} parent=11 // pred_region
          _
        $region20: #{multiscale_extension_pyramid_forward.4} parent=11 // pred_fallthru
          _
      $region12: #{multiscale_extension_pyramid_forward.4} parent=5 // pred_fallthru
        _
      %p161 = scmp.lt.s32.totalorder %s13, 2
      // Predicated region
      $region21: #{multiscale_extension_pyramid_forward.4} parent=5 // pred_check
        %p162 = pneg %p161
      $region22: #{multiscale_extension_pyramid_forward.4} parent=5 // pred_check_branch
        %164 = sbr.rel (%p162) target = $region24
      $region23: #{multiscale_extension_pyramid_forward.4} parent=5 // pred_region
        // Predicated region
        $region25: #{multiscale_extension_pyramid_forward.4} parent=23 // pred_check
          %p165 = pneg %p33
        $region26: #{multiscale_extension_pyramid_forward.4} parent=23 // pred_check_branch
          %167 = sbr.rel (%p165) target = $region28
        $region27: #{multiscale_extension_pyramid_forward.4} parent=23 // pred_region
          %p168 = scmp.lt.s32.totalorder %s13, 1
          %s169 = scalar_select %p168, %s13, 1
          %s170 = scalar_lea.vmem %s0, %s169
        $region28: #{multiscale_extension_pyramid_forward.4} parent=23 // pred_fallthru
          _
      $region24: #{multiscale_extension_pyramid_forward.4} parent=5 // pred_fallthru
        _
      %p171 = scmp.le.s32.totalorder 1, %s13
      %p172 = scmp.lt.s32.totalorder %s13, 3
      %p173 = pnand %p171, %p172
      %p174 = pneg %p173
      // Predicated region
      $region29: #{multiscale_extension_pyramid_forward.4} parent=5 // pred_check
        _
      $region30: #{multiscale_extension_pyramid_forward.4} parent=5 // pred_check_branch
        %176 = sbr.rel (%p173) target = $region32
      $region31: #{multiscale_extension_pyramid_forward.4} parent=5 // pred_region
        %s177 = ssub.s32 %s13, 1
        // Predicated region
        $region33: #{multiscale_extension_pyramid_forward.4} parent=31 // pred_check
          %p178 = pneg %p60
        $region34: #{multiscale_extension_pyramid_forward.4} parent=31 // pred_check_branch
          %180 = sbr.rel (%p178) target = $region36
        $region35: #{multiscale_extension_pyramid_forward.4} parent=31 // pred_region
          %182 = dma.done [#allocation4], 16
        $region36: #{multiscale_extension_pyramid_forward.4} parent=31 // pred_fallthru
          _
        %183 = sfence
        %p184 = scmp.lt.s32.totalorder %s18, 1
        %s185 = scalar_select %p184, %s18, 1
        %s186 = scalar_lea.vmem %s0, %s185
        %p187 = pneg %p39
        %p188 = pneg %p36
        %p189 = pneg %p60
        %p190 = pneg %p57
        %p191 = pneg %p81
        %p192 = pneg %p78
        %p193 = pneg %p107
        %p194 = pneg %p104
        %p195 = scmp.lt.s32.totalorder %s18, 1
        %s196 = scalar_select %p195, %s18, 1
        %s197 = scalar_lea.vmem %s3, %s196
        %p198 = pneg %p133
        %p199 = pneg %p130
        %p200 = scmp.lt.s32.totalorder %s18, 1
        %s201 = scalar_select %p200, %s18, 1
        %s202 = scalar_lea.vmem %s4, %s201
        %p203 = scmp.lt.s32.totalorder %s18, 1
        %s204 = scalar_select %p203, %s18, 1
        %s205 = scalar_lea.vmem %s0, %s204
        %p206 = scmp.lt.s32.totalorder %s18, 1
        %s207 = scalar_select %p206, %s18, 1
        %s208 = scalar_lea.vmem %s3, %s207
        %p209 = scmp.lt.s32.totalorder %s18, 1
        %s210 = scalar_select %p209, %s18, 1
        %s211 = scalar_lea.vmem %s4, %s210
        %v212 = vld [vmem:[%s205] sm:$0x1]
        %v213 = vlaneseq
        %v214 = vand.u32 %v213, 127
        %v215 = vlaneseq
        %v216 = vshrl.u32 %v215, 7
        %v217 = vmul.u32 %v216, 128
        %v218 = vadd.s32 %v217, %v214
        %v219 = vand.u32 %v214, 7
        %s220 = sld [smem:[#allocation2]]
        %v221 = vstv %s220
        %v222 = vadd.f32 %v221, 0.0
        %s223 = sld [smem:[#allocation3]]
        %224 = vrot.lane.b32.xlu0 %v212, 9
        %v225 = vpop.permute.xlu0 %224
        %vm226 = vcmp.ge.s32.totalorder %v218, 8
        %vm227 = vcmp.ne.s32.totalorder %v219, 0
        %vm228 = vmand %vm226, %vm227
        %v229 = vsel %vm228, %v225, 0.0
        %v230 = vstv %s223
        %v231 = vmul.f32 %v229, %v230
        %v232 = vadd.f32 %v222, %v231
        %s233 = sld [smem:[#allocation3 + $0x1]]
        %234 = vrot.lane.b32.xlu0 %v212, 8
        %v235 = vpop.permute.xlu0 %234
        %v236 = vsel %vm226, %v235, 0.0
        %v237 = vstv %s233
        %v238 = vmul.f32 %v236, %v237
        %v239 = vadd.f32 %v232, %v238
        %s240 = sld [smem:[#allocation3 + $0x2]]
        %241 = vrot.lane.b32.xlu0 %v212, 7
        %v242 = vpop.permute.xlu0 %241
        %vm243 = vcmp.ne.s32.totalorder %v219, 7
        %vm244 = vmand %vm226, %vm243
        %v245 = vsel %vm244, %v242, 0.0
        %v246 = vstv %s240
        %v247 = vmul.f32 %v245, %v246
        %v248 = vadd.f32 %v239, %v247
        %s249 = sld [smem:[#allocation3 + $0x3]]
        %250 = vrot.lane.b32.xlu0 %v212, 1
        %v251 = vpop.permute.xlu0 %250
        %v252 = vsel %vm227, %v251, 0.0
        %v253 = vstv %s249
        %v254 = vmul.f32 %v252, %v253
        %v255 = vadd.f32 %v248, %v254
        %s256 = sld [smem:[#allocation3 + $0x4]]
        %v257 = vstv %s256
        %v258 = vmul.f32 %v212, %v257
        %v259 = vadd.f32 %v255, %v258
        %s260 = sld [smem:[#allocation3 + $0x5]]
        %261 = vrot.lane.b32.xlu0 %v212, 127
        %v262 = vpop.permute.xlu0 %261
        %v263 = vsel %vm243, %v262, 0.0
        %v264 = vstv %s260
        %v265 = vmul.f32 %v263, %v264
        %v266 = vadd.f32 %v259, %v265
        %s267 = sld [smem:[#allocation3 + $0x6]]
        %268 = vrot.lane.b32.xlu0 %v212, 121
        %v269 = vpop.permute.xlu0 %268
        %vm270 = vcmp.lt.s32.totalorder %v218, 56
        %vm271 = vmand %vm270, %vm227
        %v272 = vsel %vm271, %v269, 0.0
        %v273 = vstv %s267
        %v274 = vmul.f32 %v272, %v273
        %v275 = vadd.f32 %v266, %v274
        %s276 = sld [smem:[#allocation3 + $0x7]]
        %277 = vrot.lane.b32.xlu0 %v212, 120
        %v278 = vpop.permute.xlu0 %277
        %v279 = vsel %vm270, %v278, 0.0
        %v280 = vstv %s276
        %v281 = vmul.f32 %v279, %v280
        %v282 = vadd.f32 %v275, %v281
        %s283 = sld [smem:[#allocation3 + $0x8]]
        %284 = vrot.lane.b32.xlu0 %v212, 119
        %v285 = vpop.permute.xlu0 %284
        %vm286 = vmand %vm270, %vm243
        %v287 = vsel %vm286, %v285, 0.0
        %v288 = vstv %s283
        %v289 = vmul.f32 %v287, %v288
        %v290 = vadd.f32 %v282, %v289
        %291 = vst [vmem:[%s211] sm:$0x1] %v290
        %v292 = vsub.f32 0.0, %v290
        %v293 = vmul.f32 %v292, 1.442695
        %v294 = vpow.pop %v293
        %v295 = vadd.f32 %v294, 1.0
        %v296 = vrcp.pop %v295
        %v297 = vmul.f32 %v295, %v296
        %v298 = vsub.f32 1.0, %v297
        %v299 = vmul.f32 %v296, %v298
        %v300 = vadd.f32 %v296, %v299
        %vm301 = vweird.f32 %v295
        %vm302 = vweird.f32 %v296
        %vm303 = vmor %vm301, %vm302
        %v304 = vsel %vm303, %v296, %v300
        %v305 = vand.u32 2147483647, %v295
        %vm306 = vcmp.eq.f32.partialorder %v305, 8.507059e+37
        %v307 = vand.u32 %v295, 2147483648
        %v308 = vor.u32 1.1754944e-38, %v307
        %v309 = vsel %vm306, %v308, %v304
        %v310 = vmul.f32 1.0, %v309
        %311 = vst [vmem:[%s208] sm:$0x1] %v310
        %p312 = scmp.lt.s32.totalorder %s18, 1
        %s313 = scalar_select %p312, %s18, 1
        %s314 = scalar_lea.vmem %s3, %s313
        %p315 = scmp.lt.s32.totalorder %s18, 1
        %s316 = scalar_select %p315, %s18, 1
        %s317 = scalar_lea.vmem %s4, %s316
        // Predicated region
        $region37: #{multiscale_extension_pyramid_forward.4} parent=31 // pred_check
          %p318 = pneg %p104
        $region38: #{multiscale_extension_pyramid_forward.4} parent=31 // pred_check_branch
          %320 = sbr.rel (%p318) target = $region40
        $region39: #{multiscale_extension_pyramid_forward.4} parent=31 // pred_region
          _
        $region40: #{multiscale_extension_pyramid_forward.4} parent=31 // pred_fallthru
          _
        // Predicated region
        $region41: #{multiscale_extension_pyramid_forward.4} parent=31 // pred_check
          %p321 = pneg %p130
        $region42: #{multiscale_extension_pyramid_forward.4} parent=31 // pred_check_branch
          %323 = sbr.rel (%p321) target = $region44
        $region43: #{multiscale_extension_pyramid_forward.4} parent=31 // pred_region
          _
        $region44: #{multiscale_extension_pyramid_forward.4} parent=31 // pred_fallthru
          _
      $region32: #{multiscale_extension_pyramid_forward.4} parent=5 // pred_fallthru
        _
      %p324 = scmp.le.s32.totalorder 2, %s13
      // Predicated region
      $region45: #{multiscale_extension_pyramid_forward.4} parent=5 // pred_check
        %p325 = pneg %p324
      $region46: #{multiscale_extension_pyramid_forward.4} parent=5 // pred_check_branch
        %327 = sbr.rel (%p325) target = $region48
      $region47: #{multiscale_extension_pyramid_forward.4} parent=5 // pred_region
        %s328 = ssub.s32 %s13, 2
        // Predicated region
        $region49: #{multiscale_extension_pyramid_forward.4} parent=47 // pred_check
          %p329 = pneg %p110
        $region50: #{multiscale_extension_pyramid_forward.4} parent=47 // pred_check_branch
          %331 = sbr.rel (%p329) target = $region52
        $region51: #{multiscale_extension_pyramid_forward.4} parent=47 // pred_region
          %p332 = scmp.lt.s32.totalorder %s19, 1
          %s333 = scalar_select %p332, %s19, 1
          %s334 = scalar_lea.vmem %s3, %s333
        $region52: #{multiscale_extension_pyramid_forward.4} parent=47 // pred_fallthru
          _
        // Predicated region
        $region53: #{multiscale_extension_pyramid_forward.4} parent=47 // pred_check
          %p335 = pneg %p136
        $region54: #{multiscale_extension_pyramid_forward.4} parent=47 // pred_check_branch
          %337 = sbr.rel (%p335) target = $region56
        $region55: #{multiscale_extension_pyramid_forward.4} parent=47 // pred_region
          %p338 = scmp.lt.s32.totalorder %s19, 1
          %s339 = scalar_select %p338, %s19, 1
          %s340 = scalar_lea.vmem %s4, %s339
        $region56: #{multiscale_extension_pyramid_forward.4} parent=47 // pred_fallthru
          _
      $region48: #{multiscale_extension_pyramid_forward.4} parent=5 // pred_fallthru
        _
    $region6: #{multiscale_extension_pyramid_forward.4} parent=1 // loop_footer
      %s17 = sadd.s32 1, %s13
    $region7: #{multiscale_extension_pyramid_forward.4} parent=1 // loop_footer_branch
      %12 = sbr.rel target = $region3
    $region8: #{multiscale_extension_pyramid_forward.4} parent=1 // loop_exit
      _
    %341 = vsyncpa [#allocation4], 1
    %s342 = scalar_lea.sflag [#allocation4], 1
    %343 = vsyncpa %s342, 1

// kernel: multiscale_extension_pyramid_forward.5
$region0: #{multiscale_extension_pyramid_forward.5}
  #allocation0 [shape = 'u32[]', space=smem, size = 0x4, offset = 0x4, fixed_abs, tag = 'smem constant byte address 0x4 - core index']
  #allocation1 [shape = 'u32[72,128]{1,0:T(1,128)}', space=vmem, size = 0x9000, scoped, tag = 'internal scratch']
  #allocation2 [shape = 'f32[1]{0:T(128)S(6)}', space=smem, size = 0x200, scoped, tag = 'scoped memory for multiscale_extension_pyramid_forward.5']
  %s0 = inlined_call_operand.vmem [shape: f32[2,1,128], index: 0, kind: input, shape index: {}]
  %s1 = inlined_call_operand.vmem [shape: f32[9], index: 1, kind: input, shape index: {}]
  %s2 = inlined_call_operand.<no memory space> [shape: f32[1], index: 2, kind: input, shape index: {}]
  %s3 = inlined_call_operand.vmem [shape: f32[2,1,128], index: 3, kind: output, shape index: {}]
  %s4 = sld [smem:[#allocation0]]
  $region49: #{multiscale_extension_pyramid_forward.5} parent=0
    _
  %s6 = ssub.s32 1, %s4
  %s7 = scalar_select 0, %s6, %s4
  %8 = sst [smem:[#allocation2]] %s2
  $region1: #{multiscale_extension_pyramid_forward.5} parent=0
    #allocation3 [shape = 'u8[512]{0}', space=smem, size = 0x200, scoped, tag = 'input window, operand 1, single buffered']
    #allocation4 [shape = 's32[2]{0}', space=sflag, size = 0x8, scoped, tag = 'scoped memory for multiscale_extension_pyramid_forward.5']
    %9 = vsyncpa [#allocation4], 0
    loop: start=0, step=1, limit=4
    $region2: #{multiscale_extension_pyramid_forward.5} parent=1 // loop_pre_header
      _
    $region3: #{multiscale_extension_pyramid_forward.5} parent=1 // loop_header
      %s11 = sphi 0, %s15
      %p12 = scmp.ge.s32.totalorder %s11, 4
      %s21 = sphi 0, %s23
      %s24 = sphi 0, %s21
      %s25 = sphi 0, %s24
      %s41 = sphi 0, %s25
      %s45 = sphi 0, %s45
      %s47 = sphi 0, %s45
      %s48 = sphi 0, %s47
      %s62 = sphi 0, %s48
      %s66 = sphi 0, %s66
      %s68 = sphi 0, %s66
      %s69 = sphi 0, %s68
      %s83 = sphi 0, %s69
      %s89 = sphi 0, %s91
      %s92 = sphi 0, %s89
      %s93 = sphi 0, %s92
      %s109 = sphi 0, %s93
    $region4: #{multiscale_extension_pyramid_forward.5} parent=1 // loop_header_branch
      %14 = sbr.rel (%p12) target = $region8
    $region5: #{multiscale_extension_pyramid_forward.5} parent=1 // loop_body
      %s16 = ssub.s32 %s11, 1
      %s17 = ssub.s32 %s11, 2
      %s18 = sadd.s32 %s11, 1
      %s19 = ssub.s32 %s11, %s18
      %p20 = scmp.eq.s32.totalorder %s19, 0
      %s22 = sadd.s32 %s21, 1
      %s23 = scalar_select %p20, %s21, %s22
      %p26 = pneg %p20
      %p27 = scmp.eq.s32.totalorder %s11, 1
      %p28 = por %p26, %p27
      %p29 = scmp.ne.s32.totalorder %s21, %s24
      %p30 = scmp.eq.s32.totalorder %s11, 0
      %p31 = por %p29, %p30
      %p32 = scmp.ne.s32.totalorder %s21, %s24
      %p33 = scmp.eq.s32.totalorder %s16, 1
      %p34 = por %p32, %p33
      %p35 = scmp.ne.s32.totalorder %s24, %s25
      %p36 = scmp.eq.s32.totalorder %s16, 0
      %p37 = por %p35, %p36
      %p38 = scmp.ne.s32.totalorder %s24, %s25
      %p39 = scmp.eq.s32.totalorder %s17, 1
      %p40 = por %p38, %p39
      %p42 = scmp.ne.s32.totalorder %s25, %s41
      %p43 = scmp.eq.s32.totalorder %s17, 0
      %p44 = por %p42, %p43
      %s46 = sadd.s32 %s45, 1
      %p49 = scmp.eq.s32.totalorder %s11, 1
      %p50 = scmp.ne.s32.totalorder %s45, %s47
      %p51 = scmp.eq.s32.totalorder %s11, 0
      %p52 = por %p50, %p51
      %p53 = scmp.ne.s32.totalorder %s45, %s47
      %p54 = scmp.eq.s32.totalorder %s16, 1
      %p55 = por %p53, %p54
      %p56 = scmp.ne.s32.totalorder %s47, %s48
      %p57 = scmp.eq.s32.totalorder %s16, 0
      %p58 = por %p56, %p57
      %p59 = scmp.ne.s32.totalorder %s47, %s48
      %p60 = scmp.eq.s32.totalorder %s17, 1
      %p61 = por %p59, %p60
      %p63 = scmp.ne.s32.totalorder %s48, %s62
      %p64 = scmp.eq.s32.totalorder %s17, 0
      %p65 = por %p63, %p64
      %s67 = sadd.s32 %s66, 1
      %p70 = scmp.eq.s32.totalorder %s11, 1
      %p71 = scmp.ne.s32.totalorder %s66, %s68
      %p72 = scmp.eq.s32.totalorder %s11, 0
      %p73 = por %p71, %p72
      %p74 = scmp.ne.s32.totalorder %s66, %s68
      %p75 = scmp.eq.s32.totalorder %s16, 1
      %p76 = por %p74, %p75
      %p77 = scmp.ne.s32.totalorder %s68, %s69
      %p78 = scmp.eq.s32.totalorder %s16, 0
      %p79 = por %p77, %p78
      %p80 = scmp.ne.s32.totalorder %s68, %s69
      %p81 = scmp.eq.s32.totalorder %s17, 1
      %p82 = por %p80, %p81
      %p84 = scmp.ne.s32.totalorder %s69, %s83
      %p85 = scmp.eq.s32.totalorder %s17, 0
      %p86 = por %p84, %p85
      %s87 = ssub.s32 %s11, %s18
      %p88 = scmp.eq.s32.totalorder %s87, 0
      %s90 = sadd.s32 %s89, 1
      %s91 = scalar_select %p88, %s89, %s90
      %p94 = pneg %p88
      %p95 = scmp.eq.s32.totalorder %s11, 1
      %p96 = por %p94, %p95
      %p97 = scmp.ne.s32.totalorder %s89, %s92
      %p98 = scmp.eq.s32.totalorder %s11, 0
      %p99 = por %p97, %p98
      %p100 = scmp.ne.s32.totalorder %s89, %s92
      %p101 = scmp.eq.s32.totalorder %s16, 1
      %p102 = por %p100, %p101
      %p103 = scmp.ne.s32.totalorder %s92, %s93
      %p104 = scmp.eq.s32.totalorder %s16, 0
      %p105 = por %p103, %p104
      %p106 = scmp.ne.s32.totalorder %s92, %s93
      %p107 = scmp.eq.s32.totalorder %s17, 1
      %p108 = por %p106, %p107
      %p110 = scmp.ne.s32.totalorder %s93, %s109
      %p111 = scmp.eq.s32.totalorder %s17, 0
      %p112 = por %p110, %p111
      %p113 = scmp.le.s32.totalorder 1, %s11
      %p114 = scmp.lt.s32.totalorder %s11, 3
      %p115 = pnand %p113, %p114
      %p116 = pneg %p115
      // Predicated region
      $region9: #{multiscale_extension_pyramid_forward.5} parent=5 // pred_check
        _
      $region10: #{multiscale_extension_pyramid_forward.5} parent=5 // pred_check_branch
        %118 = sbr.rel (%p115) target = $region12
      $region11: #{multiscale_extension_pyramid_forward.5} parent=5 // pred_region
        %s119 = ssub.s32 %s11, 1
        // Predicated region
        $region13: #{multiscale_extension_pyramid_forward.5} parent=11 // pred_check
          %p120 = pneg %p58
        $region14: #{multiscale_extension_pyramid_forward.5} parent=11 // pred_check_branch
          %122 = sbr.rel (%p120) target = $region16
        $region15: #{multiscale_extension_pyramid_forward.5} parent=11 // pred_region
          %124 = vsyncadd [#allocation4], 0
          %s126 = sshll.u32 %s1, 4
          %s127 = int_to_ptr.vmem [resolvable:$true] %s126
          %129 = dma.vmem_to_smem %s127, 16, [#allocation3], [#allocation4]
        $region16: #{multiscale_extension_pyramid_forward.5} parent=11 // pred_fallthru
          _
        // Predicated region
        $region17: #{multiscale_extension_pyramid_forward.5} parent=11 // pred_check
          %p130 = pneg %p79
        $region18: #{multiscale_extension_pyramid_forward.5} parent=11 // pred_check_branch
          %132 = sbr.rel (%p130) target = $region20
        $region19: #{multiscale_extension_pyramid_forward.5} parent=11 // pred_region
          _
        $region20: #{multiscale_extension_pyramid_forward.5} parent=11 // pred_fallthru
          _
      $region12: #{multiscale_extension_pyramid_forward.5} parent=5 // pred_fallthru
        _
      %p133 = scmp.lt.s32.totalorder %s11, 2
      // Predicated region
      $region21: #{multiscale_extension_pyramid_forward.5} parent=5 // pred_check
        %p134 = pneg %p133
      $region22: #{multiscale_extension_pyramid_forward.5} parent=5 // pred_check_branch
        %136 = sbr.rel (%p134) target = $region24
      $region23: #{multiscale_extension_pyramid_forward.5} parent=5 // pred_region
        // Predicated region
        $region25: #{multiscale_extension_pyramid_forward.5} parent=23 // pred_check
          %p137 = pneg %p31
        $region26: #{multiscale_extension_pyramid_forward.5} parent=23 // pred_check_branch
          %139 = sbr.rel (%p137) target = $region28
        $region27: #{multiscale_extension_pyramid_forward.5} parent=23 // pred_region
          %p140 = scmp.lt.s32.totalorder %s11, 1
          %s141 = scalar_select %p140, %s11, 1
          %s142 = scalar_lea.vmem %s0, %s141
        $region28: #{multiscale_extension_pyramid_forward.5} parent=23 // pred_fallthru
          _
      $region24: #{multiscale_extension_pyramid_forward.5} parent=5 // pred_fallthru
        _
      %p143 = scmp.le.s32.totalorder 1, %s11
      %p144 = scmp.lt.s32.totalorder %s11, 3
      %p145 = pnand %p143, %p144
      %p146 = pneg %p145
      // Predicated region
      $region29: #{multiscale_extension_pyramid_forward.5} parent=5 // pred_check
        _
      $region30: #{multiscale_extension_pyramid_forward.5} parent=5 // pred_check_branch
        %148 = sbr.rel (%p145) target = $region32
      $region31: #{multiscale_extension_pyramid_forward.5} parent=5 // pred_region
        %s149 = ssub.s32 %s11, 1
        // Predicated region
        $region33: #{multiscale_extension_pyramid_forward.5} parent=31 // pred_check
          %p150 = pneg %p58
        $region34: #{multiscale_extension_pyramid_forward.5} parent=31 // pred_check_branch
          %152 = sbr.rel (%p150) target = $region36
        $region35: #{multiscale_extension_pyramid_forward.5} parent=31 // pred_region
          %154 = dma.done [#allocation4], 16
        $region36: #{multiscale_extension_pyramid_forward.5} parent=31 // pred_fallthru
          _
        %155 = sfence
        %p156 = scmp.lt.s32.totalorder %s16, 1
        %s157 = scalar_select %p156, %s16, 1
        %s158 = scalar_lea.vmem %s0, %s157
        %p159 = pneg %p37
        %p160 = pneg %p34
        %p161 = pneg %p58
        %p162 = pneg %p55
        %p163 = pneg %p79
        %p164 = pneg %p76
        %p165 = pneg %p105
        %p166 = pneg %p102
        %p167 = scmp.lt.s32.totalorder %s16, 1
        %s168 = scalar_select %p167, %s16, 1
        %s169 = scalar_lea.vmem %s3, %s168
        %p170 = scmp.lt.s32.totalorder %s16, 1
        %s171 = scalar_select %p170, %s16, 1
        %s172 = scalar_lea.vmem %s0, %s171
        %p173 = scmp.lt.s32.totalorder %s16, 1
        %s174 = scalar_select %p173, %s16, 1
        %s175 = scalar_lea.vmem %s3, %s174
        %v176 = vld [vmem:[%s172] sm:$0x1]
        %v177 = vlaneseq
        %v178 = vand.u32 %v177, 127
        %v179 = vlaneseq
        %v180 = vshrl.u32 %v179, 7
        %v181 = vmul.u32 %v180, 128
        %v182 = vadd.s32 %v181, %v178
        %v183 = vand.u32 %v178, 3
        %s184 = sld [smem:[#allocation2]]
        %v185 = vstv %s184
        %v186 = vadd.f32 %v185, 0.0
        %s187 = sld [smem:[#allocation3]]
        %188 = vrot.lane.b32.xlu0 %v176, 5
        %v189 = vpop.permute.xlu0 %188
        %vm190 = vcmp.ge.s32.totalorder %v182, 4
        %vm191 = vcmp.ne.s32.totalorder %v183, 0
        %vm192 = vmand %vm190, %vm191
        %v193 = vsel %vm192, %v189, 0.0
        %v194 = vstv %s187
        %v195 = vmul.f32 %v193, %v194
        %v196 = vadd.f32 %v186, %v195
        %s197 = sld [smem:[#allocation3 + $0x1]]
        %198 = vrot.lane.b32.xlu0 %v176, 4
        %v199 = vpop.permute.xlu0 %198
        %v200 = vsel %vm190, %v199, 0.0
        %v201 = vstv %s197
        %v202 = vmul.f32 %v200, %v201
        %v203 = vadd.f32 %v196, %v202
        %s204 = sld [smem:[#allocation3 + $0x2]]
        %205 = vrot.lane.b32.xlu0 %v176, 3
        %v206 = vpop.permute.xlu0 %205
        %vm207 = vcmp.ne.s32.totalorder %v183, 3
        %vm208 = vmand %vm190, %vm207
        %v209 = vsel %vm208, %v206, 0.0
        %v210 = vstv %s204
        %v211 = vmul.f32 %v209, %v210
        %v212 = vadd.f32 %v203, %v211
        %s213 = sld [smem:[#allocation3 + $0x3]]
        %214 = vrot.lane.b32.xlu0 %v176, 1
        %v215 = vpop.permute.xlu0 %214
        %v216 = vsel %vm191, %v215, 0.0
        %v217 = vstv %s213
        %v218 = vmul.f32 %v216, %v217
        %v219 = vadd.f32 %v212, %v218
        %s220 = sld [smem:[#allocation3 + $0x4]]
        %v221 = vstv %s220
        %v222 = vmul.f32 %v176, %v221
        %v223 = vadd.f32 %v219, %v222
        %s224 = sld [smem:[#allocation3 + $0x5]]
        %225 = vrot.lane.b32.xlu0 %v176, 127
        %v226 = vpop.permute.xlu0 %225
        %v227 = vsel %vm207, %v226, 0.0
        %v228 = vstv %s224
        %v229 = vmul.f32 %v227, %v228
        %v230 = vadd.f32 %v223, %v229
        %s231 = sld [smem:[#allocation3 + $0x6]]
        %232 = vrot.lane.b32.xlu0 %v176, 125
        %v233 = vpop.permute.xlu0 %232
        %vm234 = vcmp.lt.s32.totalorder %v182, 12
        %vm235 = vmand %vm234, %vm191
        %v236 = vsel %vm235, %v233, 0.0
        %v237 = vstv %s231
        %v238 = vmul.f32 %v236, %v237
        %v239 = vadd.f32 %v230, %v238
        %s240 = sld [smem:[#allocation3 + $0x7]]
        %241 = vrot.lane.b32.xlu0 %v176, 124
        %v242 = vpop.permute.xlu0 %241
        %v243 = vsel %vm234, %v242, 0.0
        %v244 = vstv %s240
        %v245 = vmul.f32 %v243, %v244
        %v246 = vadd.f32 %v239, %v245
        %s247 = sld [smem:[#allocation3 + $0x8]]
        %248 = vrot.lane.b32.xlu0 %v176, 123
        %v249 = vpop.permute.xlu0 %248
        %vm250 = vmand %vm234, %vm207
        %v251 = vsel %vm250, %v249, 0.0
        %v252 = vstv %s247
        %v253 = vmul.f32 %v251, %v252
        %v254 = vadd.f32 %v246, %v253
        %v255 = vsub.f32 0.0, %v254
        %v256 = vmul.f32 %v255, 1.442695
        %v257 = vpow.pop %v256
        %v258 = vadd.f32 %v257, 1.0
        %v259 = vrcp.pop %v258
        %v260 = vmul.f32 %v258, %v259
        %v261 = vsub.f32 1.0, %v260
        %v262 = vmul.f32 %v259, %v261
        %v263 = vadd.f32 %v259, %v262
        %vm264 = vweird.f32 %v258
        %vm265 = vweird.f32 %v259
        %vm266 = vmor %vm264, %vm265
        %v267 = vsel %vm266, %v259, %v263
        %v268 = vand.u32 2147483647, %v258
        %vm269 = vcmp.eq.f32.partialorder %v268, 8.507059e+37
        %v270 = vand.u32 %v258, 2147483648
        %v271 = vor.u32 1.1754944e-38, %v270
        %v272 = vsel %vm269, %v271, %v267
        %v273 = vmul.f32 1.0, %v272
        %274 = vst [vmem:[%s175] sm:$0x1] %v273
        %p275 = scmp.lt.s32.totalorder %s16, 1
        %s276 = scalar_select %p275, %s16, 1
        %s277 = scalar_lea.vmem %s3, %s276
        // Predicated region
        $region37: #{multiscale_extension_pyramid_forward.5} parent=31 // pred_check
          %p278 = pneg %p102
        $region38: #{multiscale_extension_pyramid_forward.5} parent=31 // pred_check_branch
          %280 = sbr.rel (%p278) target = $region40
        $region39: #{multiscale_extension_pyramid_forward.5} parent=31 // pred_region
          _
        $region40: #{multiscale_extension_pyramid_forward.5} parent=31 // pred_fallthru
          _
      $region32: #{multiscale_extension_pyramid_forward.5} parent=5 // pred_fallthru
        _
      %p281 = scmp.le.s32.totalorder 2, %s11
      // Predicated region
      $region41: #{multiscale_extension_pyramid_forward.5} parent=5 // pred_check
        %p282 = pneg %p281
      $region42: #{multiscale_extension_pyramid_forward.5} parent=5 // pred_check_branch
        %284 = sbr.rel (%p282) target = $region44
      $region43: #{multiscale_extension_pyramid_forward.5} parent=5 // pred_region
        %s285 = ssub.s32 %s11, 2
        // Predicated region
        $region45: #{multiscale_extension_pyramid_forward.5} parent=43 // pred_check
          %p286 = pneg %p108
        $region46: #{multiscale_extension_pyramid_forward.5} parent=43 // pred_check_branch
          %288 = sbr.rel (%p286) target = $region48
        $region47: #{multiscale_extension_pyramid_forward.5} parent=43 // pred_region
          %p289 = scmp.lt.s32.totalorder %s17, 1
          %s290 = scalar_select %p289, %s17, 1
          %s291 = scalar_lea.vmem %s3, %s290
        $region48: #{multiscale_extension_pyramid_forward.5} parent=43 // pred_fallthru
          _
      $region44: #{multiscale_extension_pyramid_forward.5} parent=5 // pred_fallthru
        _
    $region6: #{multiscale_extension_pyramid_forward.5} parent=1 // loop_footer
      %s15 = sadd.s32 1, %s11
    $region7: #{multiscale_extension_pyramid_forward.5} parent=1 // loop_footer_branch
      %10 = sbr.rel target = $region3
    $region8: #{multiscale_extension_pyramid_forward.5} parent=1 // loop_exit
      _
    %292 = vsyncpa [#allocation4], 1
    %s293 = scalar_lea.sflag [#allocation4], 1
    %294 = vsyncpa %s293, 1

// kernel: multiscale_extension_pyramid_forward.3
$region0: #{multiscale_extension_pyramid_forward.3}
  #allocation0 [shape = 'u32[]', space=smem, size = 0x4, offset = 0x4, fixed_abs, tag = 'smem constant byte address 0x4 - core index']
  #allocation1 [shape = 'u32[72,128]{1,0:T(1,128)}', space=vmem, size = 0x9000, scoped, tag = 'internal scratch']
  #allocation2 [shape = 'f32[1]{0:T(128)S(6)}', space=smem, size = 0x200, scoped, tag = 'scoped memory for multiscale_extension_pyramid_forward.3']
  %s0 = inlined_call_operand.vmem [shape: f32[2,4,2,128], index: 0, kind: input, shape index: {}]
  %s1 = inlined_call_operand.vmem [shape: f32[4], index: 1, kind: input, shape index: {}]
  %s2 = inlined_call_operand.<no memory space> [shape: f32[1], index: 2, kind: input, shape index: {}]
  %s3 = inlined_call_operand.vmem [shape: f32[2,1,2,128], index: 3, kind: output, shape index: {}]
  %s4 = sld [smem:[#allocation0]]
  $region49: #{multiscale_extension_pyramid_forward.3} parent=0
    _
  %s6 = ssub.s32 1, %s4
  %s7 = scalar_select 0, %s6, %s4
  %8 = sst [smem:[#allocation2]] %s2
  $region1: #{multiscale_extension_pyramid_forward.3} parent=0
    #allocation3 [shape = 'u8[512]{0}', space=smem, size = 0x200, scoped, tag = 'input window, operand 1, single buffered']
    #allocation4 [shape = 's32[2]{0}', space=sflag, size = 0x8, scoped, tag = 'scoped memory for multiscale_extension_pyramid_forward.3']
    %9 = vsyncpa [#allocation4], 0
    loop: start=0, step=1, limit=4
    $region2: #{multiscale_extension_pyramid_forward.3} parent=1 // loop_pre_header
      _
    $region3: #{multiscale_extension_pyramid_forward.3} parent=1 // loop_header
      %s11 = sphi 0, %s15
      %p12 = scmp.ge.s32.totalorder %s11, 4
      %s18 = sphi 0, %s30
      %s19 = sphi 0, %s26
      %s20 = sphi 0, %s18
      %s21 = sphi 0, %s19
      %s22 = sphi 0, %s20
      %s23 = sphi 0, %s21
      %s35 = sphi 0, %s37
      %s38 = sphi 0, %s35
      %s39 = sphi 0, %s38
      %s55 = sphi 0, %s39
      %s59 = sphi 0, %s59
      %s61 = sphi 0, %s59
      %s62 = sphi 0, %s61
      %s76 = sphi 0, %s62
      %s80 = sphi 0, %s80
      %s82 = sphi 0, %s80
      %s83 = sphi 0, %s82
      %s97 = sphi 0, %s83
      %s105 = sphi 0, %s107
      %s108 = sphi 0, %s105
      %s109 = sphi 0, %s108
      %s125 = sphi 0, %s109
    $region4: #{multiscale_extension_pyramid_forward.3} parent=1 // loop_header_branch
      %14 = sbr.rel (%p12) target = $region8
    $region5: #{multiscale_extension_pyramid_forward.3} parent=1 // loop_body
      %s16 = ssub.s32 %s11, 1
      %s17 = ssub.s32 %s11, 2
      %s24 = sadd.s32 1, %s19
      %p25 = scmp.ge.s32.totalorder %s24, 1
      %s26 = scalar_select %p25, 0, %s24
      %s27 = sadd.s32 1, %s18
      %s28 = scalar_select %p25, %s27, %s18
      %p29 = scmp.ge.s32.totalorder %s28, 2
      %s30 = scalar_select %p29, 0, %s28
      %s31 = ssub.s32 %s18, %s30
      %s32 = ssub.s32 %s19, %s26
      %s33 = sor.u32 %s31, %s32
      %p34 = scmp.eq.s32.totalorder %s33, 0
      %s36 = sadd.s32 %s35, 1
      %s37 = scalar_select %p34, %s35, %s36
      %p40 = pneg %p34
      %p41 = scmp.eq.s32.totalorder %s11, 1
      %p42 = por %p40, %p41
      %p43 = scmp.ne.s32.totalorder %s35, %s38
      %p44 = scmp.eq.s32.totalorder %s11, 0
      %p45 = por %p43, %p44
      %p46 = scmp.ne.s32.totalorder %s35, %s38
      %p47 = scmp.eq.s32.totalorder %s16, 1
      %p48 = por %p46, %p47
      %p49 = scmp.ne.s32.totalorder %s38, %s39
      %p50 = scmp.eq.s32.totalorder %s16, 0
      %p51 = por %p49, %p50
      %p52 = scmp.ne.s32.totalorder %s38, %s39
      %p53 = scmp.eq.s32.totalorder %s17, 1
      %p54 = por %p52, %p53
      %p56 = scmp.ne.s32.totalorder %s39, %s55
      %p57 = scmp.eq.s32.totalorder %s17, 0
      %p58 = por %p56, %p57
      %s60 = sadd.s32 %s59, 1
      %p63 = scmp.eq.s32.totalorder %s11, 1
      %p64 = scmp.ne.s32.totalorder %s59, %s61
      %p65 = scmp.eq.s32.totalorder %s11, 0
      %p66 = por %p64, %p65
      %p67 = scmp.ne.s32.totalorder %s59, %s61
      %p68 = scmp.eq.s32.totalorder %s16, 1
      %p69 = por %p67, %p68
      %p70 = scmp.ne.s32.totalorder %s61, %s62
      %p71 = scmp.eq.s32.totalorder %s16, 0
      %p72 = por %p70, %p71
      %p73 = scmp.ne.s32.totalorder %s61, %s62
      %p74 = scmp.eq.s32.totalorder %s17, 1
      %p75 = por %p73, %p74
      %p77 = scmp.ne.s32.totalorder %s62, %s76
      %p78 = scmp.eq.s32.totalorder %s17, 0
      %p79 = por %p77, %p78
      %s81 = sadd.s32 %s80, 1
      %p84 = scmp.eq.s32.totalorder %s11, 1
      %p85 = scmp.ne.s32.totalorder %s80, %s82
      %p86 = scmp.eq.s32.totalorder %s11, 0
      %p87 = por %p85, %p86
      %p88 = scmp.ne.s32.totalorder %s80, %s82
      %p89 = scmp.eq.s32.totalorder %s16, 1
      %p90 = por %p88, %p89
      %p91 = scmp.ne.s32.totalorder %s82, %s83
      %p92 = scmp.eq.s32.totalorder %s16, 0
      %p93 = por %p91, %p92
      %p94 = scmp.ne.s32.totalorder %s82, %s83
      %p95 = scmp.eq.s32.totalorder %s17, 1
      %p96 = por %p94, %p95
      %p98 = scmp.ne.s32.totalorder %s83, %s97
      %p99 = scmp.eq.s32.totalorder %s17, 0
      %p100 = por %p98, %p99
      %s101 = ssub.s32 %s18, %s30
      %s102 = ssub.s32 %s19, %s26
      %s103 = sor.u32 %s101, %s102
      %p104 = scmp.eq.s32.totalorder %s103, 0
      %s106 = sadd.s32 %s105, 1
      %s107 = scalar_select %p104, %s105, %s106
      %p110 = pneg %p104
      %p111 = scmp.eq.s32.totalorder %s11, 1
      %p112 = por %p110, %p111
      %p113 = scmp.ne.s32.totalorder %s105, %s108
      %p114 = scmp.eq.s32.totalorder %s11, 0
      %p115 = por %p113, %p114
      %p116 = scmp.ne.s32.totalorder %s105, %s108
      %p117 = scmp.eq.s32.totalorder %s16, 1
      %p118 = por %p116, %p117
      %p119 = scmp.ne.s32.totalorder %s108, %s109
      %p120 = scmp.eq.s32.totalorder %s16, 0
      %p121 = por %p119, %p120
      %p122 = scmp.ne.s32.totalorder %s108, %s109
      %p123 = scmp.eq.s32.totalorder %s17, 1
      %p124 = por %p122, %p123
      %p126 = scmp.ne.s32.totalorder %s109, %s125
      %p127 = scmp.eq.s32.totalorder %s17, 0
      %p128 = por %p126, %p127
      %p129 = scmp.le.s32.totalorder 1, %s11
      %p130 = scmp.lt.s32.totalorder %s11, 3
      %p131 = pnand %p129, %p130
      %p132 = pneg %p131
      // Predicated region
      $region9: #{multiscale_extension_pyramid_forward.3} parent=5 // pred_check
        _
      $region10: #{multiscale_extension_pyramid_forward.3} parent=5 // pred_check_branch
        %134 = sbr.rel (%p131) target = $region12
      $region11: #{multiscale_extension_pyramid_forward.3} parent=5 // pred_region
        %s135 = ssub.s32 %s11, 1
        // Predicated region
        $region13: #{multiscale_extension_pyramid_forward.3} parent=11 // pred_check
          %p136 = pneg %p72
        $region14: #{multiscale_extension_pyramid_forward.3} parent=11 // pred_check_branch
          %138 = sbr.rel (%p136) target = $region16
        $region15: #{multiscale_extension_pyramid_forward.3} parent=11 // pred_region
          %140 = vsyncadd [#allocation4], 0
          %s142 = sshll.u32 %s1, 4
          %s143 = int_to_ptr.vmem [resolvable:$true] %s142
          %145 = dma.vmem_to_smem %s143, 16, [#allocation3], [#allocation4]
        $region16: #{multiscale_extension_pyramid_forward.3} parent=11 // pred_fallthru
          _
        // Predicated region
        $region17: #{multiscale_extension_pyramid_forward.3} parent=11 // pred_check
          %p146 = pneg %p93
        $region18: #{multiscale_extension_pyramid_forward.3} parent=11 // pred_check_branch
          %148 = sbr.rel (%p146) target = $region20
        $region19: #{multiscale_extension_pyramid_forward.3} parent=11 // pred_region
          _
        $region20: #{multiscale_extension_pyramid_forward.3} parent=11 // pred_fallthru
          _
      $region12: #{multiscale_extension_pyramid_forward.3} parent=5 // pred_fallthru
        _
      %p149 = scmp.lt.s32.totalorder %s11, 2
      // Predicated region
      $region21: #{multiscale_extension_pyramid_forward.3} parent=5 // pred_check
        %p150 = pneg %p149
      $region22: #{multiscale_extension_pyramid_forward.3} parent=5 // pred_check_branch
        %152 = sbr.rel (%p150) target = $region24
      $region23: #{multiscale_extension_pyramid_forward.3} parent=5 // pred_region
        // Predicated region
        $region25: #{multiscale_extension_pyramid_forward.3} parent=23 // pred_check
          %p153 = pneg %p45
        $region26: #{multiscale_extension_pyramid_forward.3} parent=23 // pred_check_branch
          %155 = sbr.rel (%p153) target = $region28
        $region27: #{multiscale_extension_pyramid_forward.3} parent=23 // pred_region
          %p156 = scmp.lt.s32.totalorder %s18, 1
          %s157 = scalar_select %p156, %s18, 1
          %p158 = scmp.lt.s32.totalorder %s19, 0
          %s159 = scalar_select %p158, %s19, 0
          %s160 = smul.addr %s157, 4
          %s161 = sadd.s32 %s159, %s160
          %s162 = smul.addr %s161, 2
          %s163 = scalar_lea.vmem %s0, %s162
        $region28: #{multiscale_extension_pyramid_forward.3} parent=23 // pred_fallthru
          _
      $region24: #{multiscale_extension_pyramid_forward.3} parent=5 // pred_fallthru
        _
      %p164 = scmp.le.s32.totalorder 1, %s11
      %p165 = scmp.lt.s32.totalorder %s11, 3
      %p166 = pnand %p164, %p165
      %p167 = pneg %p166
      // Predicated region
      $region29: #{multiscale_extension_pyramid_forward.3} parent=5 // pred_check
        _
      $region30: #{multiscale_extension_pyramid_forward.3} parent=5 // pred_check_branch
        %169 = sbr.rel (%p166) target = $region32
      $region31: #{multiscale_extension_pyramid_forward.3} parent=5 // pred_region
        %s170 = ssub.s32 %s11, 1
        // Predicated region
        $region33: #{multiscale_extension_pyramid_forward.3} parent=31 // pred_check
          %p171 = pneg %p72
        $region34: #{multiscale_extension_pyramid_forward.3} parent=31 // pred_check_branch
          %173 = sbr.rel (%p171) target = $region36
        $region35: #{multiscale_extension_pyramid_forward.3} parent=31 // pred_region
          %175 = dma.done [#allocation4], 16
        $region36: #{multiscale_extension_pyramid_forward.3} parent=31 // pred_fallthru
          _
        %176 = sfence
        %p177 = scmp.lt.s32.totalorder %s20, 1
        %s178 = scalar_select %p177, %s20, 1
        %p179 = scmp.lt.s32.totalorder %s21, 0
        %s180 = scalar_select %p179, %s21, 0
        %s181 = smul.addr %s178, 4
        %s182 = sadd.s32 %s180, %s181
        %s183 = smul.addr %s182, 2
        %s184 = scalar_lea.vmem %s0, %s183
        %p185 = pneg %p51
        %p186 = pneg %p48
        %p187 = pneg %p72
        %p188 = pneg %p69
        %p189 = pneg %p93
        %p190 = pneg %p90
        %p191 = pneg %p121
        %p192 = pneg %p118
        %p193 = scmp.lt.s32.totalorder %s20, 1
        %s194 = scalar_select %p193, %s20, 1
        %p195 = scmp.lt.s32.totalorder %s21, 0
        %s196 = scalar_select %p195, %s21, 0
        %s197 = sadd.s32 %s196, %s194
        %s198 = smul.addr %s197, 2
        %s199 = scalar_lea.vmem %s3, %s198
        %p200 = scmp.lt.s32.totalorder %s20, 1
        %s201 = scalar_select %p200, %s20, 1
        %p202 = scmp.lt.s32.totalorder %s21, 0
        %s203 = scalar_select %p202, %s21, 0
        %s204 = smul.addr %s201, 4
        %s205 = sadd.s32 %s203, %s204
        %s206 = smul.addr %s205, 2
        %s207 = scalar_lea.vmem %s0, %s206
        %p208 = scmp.lt.s32.totalorder %s20, 1
        %s209 = scalar_select %p208, %s20, 1
        %p210 = scmp.lt.s32.totalorder %s21, 0
        %s211 = scalar_select %p210, %s21, 0
        %s212 = sadd.s32 %s211, %s209
        %s213 = smul.addr %s212, 2
        %s214 = scalar_lea.vmem %s3, %s213
        %v215 = vld [vmem:[%s207] sm:$0x3]
        %v216 = vld [vmem:[%s207 + $0x2] sm:$0x3]
        %v217 = vld [vmem:[%s207 + $0x4] sm:$0x3]
        %v218 = vld [vmem:[%s207 + $0x6] sm:$0x3]
        %s219 = sld [smem:[#allocation2]]
        %v220 = vstv %s219
        %v221 = vadd.f32 %v220, 0.0
        %s222 = sld [smem:[#allocation3]]
        %v223 = vstv %s222
        %v224 = vmul.f32 %v215, %v223
        %v225 = vadd.f32 %v221, %v224
        %s226 = sld [smem:[#allocation3 + $0x1]]
        %v227 = vstv %s226
        %v228 = vmul.f32 %v216, %v227
        %v229 = vadd.f32 %v225, %v228
        %s230 = sld [smem:[#allocation3 + $0x2]]
        %v231 = vstv %s230
        %v232 = vmul.f32 %v217, %v231
        %v233 = vadd.f32 %v229, %v232
        %s234 = sld [smem:[#allocation3 + $0x3]]
        %v235 = vstv %s234
        %v236 = vmul.f32 %v218, %v235
        %v237 = vadd.f32 %v233, %v236
        %v238 = vsub.f32 0.0, %v237
        %v239 = vmul.f32 %v238, 1.442695
        %v240 = vpow.pop %v239
        %v241 = vadd.f32 %v240, 1.0
        %v242 = vrcp.pop %v241
        %v243 = vmul.f32 %v241, %v242
        %v244 = vsub.f32 1.0, %v243
        %v245 = vmul.f32 %v242, %v244
        %v246 = vadd.f32 %v242, %v245
        %vm247 = vweird.f32 %v241
        %vm248 = vweird.f32 %v242
        %vm249 = vmor %vm247, %vm248
        %v250 = vsel %vm249, %v242, %v246
        %v251 = vand.u32 2147483647, %v241
        %vm252 = vcmp.eq.f32.partialorder %v251, 8.507059e+37
        %v253 = vand.u32 %v241, 2147483648
        %v254 = vor.u32 1.1754944e-38, %v253
        %v255 = vsel %vm252, %v254, %v250
        %v256 = vmul.f32 1.0, %v255
        %257 = vst [vmem:[%s214] sm:$0x3] %v256
        %p258 = scmp.lt.s32.totalorder %s20, 1
        %s259 = scalar_select %p258, %s20, 1
        %p260 = scmp.lt.s32.totalorder %s21, 0
        %s261 = scalar_select %p260, %s21, 0
        %s262 = sadd.s32 %s261, %s259
        %s263 = smul.addr %s262, 2
        %s264 = scalar_lea.vmem %s3, %s263
        // Predicated region
        $region37: #{multiscale_extension_pyramid_forward.3} parent=31 // pred_check
          %p265 = pneg %p118
        $region38: #{multiscale_extension_pyramid_forward.3} parent=31 // pred_check_branch
          %267 = sbr.rel (%p265) target = $region40
        $region39: #{multiscale_extension_pyramid_forward.3} parent=31 // pred_region
          _
        $region40: #{multiscale_extension_pyramid_forward.3} parent=31 // pred_fallthru
          _
      $region32: #{multiscale_extension_pyramid_forward.3} parent=5 // pred_fallthru
        _
      %p268 = scmp.le.s32.totalorder 2, %s11
      // Predicated region
      $region41: #{multiscale_extension_pyramid_forward.3} parent=5 // pred_check
        %p269 = pneg %p268
      $region42: #{multiscale_extension_pyramid_forward.3} parent=5 // pred_check_branch
        %271 = sbr.rel (%p269) target = $region44
      $region43: #{multiscale_extension_pyramid_forward.3} parent=5 // pred_region
        %s272 = ssub.s32 %s11, 2
        // Predicated region
        $region45: #{multiscale_extension_pyramid_forward.3} parent=43 // pred_check
          %p273 = pneg %p124
        $region46: #{multiscale_extension_pyramid_forward.3} parent=43 // pred_check_branch
          %275 = sbr.rel (%p273) target = $region48
        $region47: #{multiscale_extension_pyramid_forward.3} parent=43 // pred_region
          %p276 = scmp.lt.s32.totalorder %s22, 1
          %s277 = scalar_select %p276, %s22, 1
          %p278 = scmp.lt.s32.totalorder %s23, 0
          %s279 = scalar_select %p278, %s23, 0
          %s280 = sadd.s32 %s279, %s277
          %s281 = smul.addr %s280, 2
          %s282 = scalar_lea.vmem %s3, %s281
        $region48: #{multiscale_extension_pyramid_forward.3} parent=43 // pred_fallthru
          _
      $region44: #{multiscale_extension_pyramid_forward.3} parent=5 // pred_fallthru
        _
    $region6: #{multiscale_extension_pyramid_forward.3} parent=1 // loop_footer
      %s15 = sadd.s32 1, %s11
    $region7: #{multiscale_extension_pyramid_forward.3} parent=1 // loop_footer_branch
      %10 = sbr.rel target = $region3
    $region8: #{multiscale_extension_pyramid_forward.3} parent=1 // loop_exit
      _
    %283 = vsyncpa [#allocation4], 1
    %s284 = scalar_lea.sflag [#allocation4], 1
    %285 = vsyncpa %s284, 1

</llo_original>
